<compile_context>
chip_gen: v5e
topology: v5e:2x2
jax: 0.10.0
libtpu: 0.0.40
codegen_flags: <defaults>
</compile_context>

<pallas_src>
import functools
import math

import jax
import jax.numpy as jnp
from jax import lax
from jax.experimental import pallas as pl
from jax.experimental.pallas import tpu as pltpu


# ----------------------------- kernel helpers ------------------------------ #

def _layernorm(x, gamma, beta, eps=1e-5):
    mu = jnp.mean(x, axis=-1, keepdims=True)
    var = jnp.mean((x - mu) ** 2, axis=-1, keepdims=True)
    return (x - mu) * lax.rsqrt(var + eps) * gamma + beta


# ------------------------------ Pallas kernels ----------------------------- #

def stack_kernel(x_ref, pos_ref,
                 ln1g_ref, ln1b_ref, wqkv_ref, bqkv_ref, wo_ref, bo_ref,
                 ln2g_ref, ln2b_ref, wfc_ref, bfc_ref, wpr_ref, bpr_ref,
                 o_ref, attn_ref, *, num_heads):
    """Fused transformer stack: grid = (batch blocks, layers).

    The output block (Bt, L, D) is resident across the layer axis and acts as
    the running activation; layer weights stream in per grid step.
    """
    layer = pl.program_id(1)

    @pl.when(layer == 0)
    def _():
        # fused `x = x + positional_embedding`
        o_ref[...] = x_ref[...] + pos_ref[...]

    x = o_ref[...]                                  # (Bt, L, D) resident activations
    Bt, L, D = x.shape
    H = num_heads
    hd = D // H
    scale = 1.0 / (hd ** 0.5)

    x2 = x.reshape(Bt * L, D)

    # ---- causal multi-head self-attention -------------------------------- #
    h = _layernorm(x2, ln1g_ref[0], ln1b_ref[0])
    qkv = jnp.dot(h.astype(jnp.bfloat16), wqkv_ref[0],
                  preferred_element_type=jnp.float32) + bqkv_ref[0]
    q_all = qkv[:, 0 * D:1 * D]
    k_all = qkv[:, 1 * D:2 * D]
    v_all = qkv[:, 2 * D:3 * D]

    row_ids = lax.broadcasted_iota(jnp.int32, (L, L), 0)
    col_ids = lax.broadcasted_iota(jnp.int32, (L, L), 1)
    causal = (col_ids <= row_ids)[None]             # (1, L, L)

    # Per-head batched (over Bt) attention; head outputs land in a single VMEM
    # slab via static lane slices (no concatenate, no H live head outputs).
    for hh in range(H):
        sl = slice(hh * hd, (hh + 1) * hd)
        qh = q_all[:, sl].reshape(Bt, L, hd).astype(jnp.bfloat16)
        kh = k_all[:, sl].reshape(Bt, L, hd).astype(jnp.bfloat16)
        vh = v_all[:, sl].reshape(Bt, L, hd).astype(jnp.bfloat16)
        s = jnp.einsum('bqd,bkd->bqk', qh, kh,
                       preferred_element_type=jnp.float32) * scale
        s = jnp.where(causal, s, -1e30)
        s = s - jnp.max(s, axis=-1, keepdims=True)
        p = jnp.exp(s)
        p = p * pl.reciprocal(jnp.sum(p, axis=-1, keepdims=True), approx=True)
        ah = jnp.einsum('bqk,bkd->bqd', p.astype(jnp.bfloat16), vh,
                        preferred_element_type=jnp.float32)
        attn_ref[:, sl] = ah.reshape(Bt * L, hd)

    attn = jnp.dot(attn_ref[...].astype(jnp.bfloat16), wo_ref[0],
                   preferred_element_type=jnp.float32) + bo_ref[0]
    xa = x2 + attn

    # ---- MLP with QuickGELU ----------------------------------------------- #
    # TODO(synk): for v7x (64 MiB VMEM) at D=768, tile w_fc/w_proj over the 4*D
    # hidden dim with an extra 'arbitrary' grid axis instead of loading whole.
    h2 = _layernorm(xa, ln2g_ref[0], ln2b_ref[0])
    f = jnp.dot(h2.astype(jnp.bfloat16), wfc_ref[0],
                preferred_element_type=jnp.float32) + bfc_ref[0]
    f = f * jax.nn.sigmoid(1.702 * f)               # QuickGELU
    f = jnp.dot(f.astype(jnp.bfloat16), wpr_ref[0],
                preferred_element_type=jnp.float32) + bpr_ref[0]

    o_ref[...] = (xa + f).reshape(Bt, L, D)


def final_kernel(x_ref, g_ref, b_ref, proj_ref, o_ref):
    """ln_final + text_projection on the already-gathered (B, D) EOT rows."""
    sel = _layernorm(x_ref[...], g_ref[...], b_ref[...])
    o_ref[...] = jnp.dot(sel, proj_ref[...], preferred_element_type=jnp.float32)


# --------------------------------- wrapper --------------------------------- #

def _choose_block_b(B, L, target_rows=256):
    """Pick rows-per-grid-step: big MXU M = block_b*L, but keep >=2 parallel
    batch blocks (megacore / v7x dual-TC) when the batch allows it."""
    divisors = [d for d in range(1, B + 1) if B % d == 0]
    good = [d for d in divisors if d * L >= target_rows and B // d >= 2]
    if good:
        return min(good)
    good = [d for d in divisors if B // d >= 2]
    if good:
        return max(good)
    return B


def text_encoder_forward(x, tokenized_prompts, params, *, block_b=None):
    B, L, D = x.shape
    E = params["text_projection"].shape[1]
    H = params["num_heads"]
    n_layers = params["w_qkv"].shape[0]

    if block_b is None:
        block_b = _choose_block_b(B, L)
    assert B % block_b == 0, (B, block_b)

    weight_args = (
        params["ln1_g"], params["ln1_b"], params["w_qkv"], params["b_qkv"],
        params["w_out"], params["b_out"], params["ln2_g"], params["ln2_b"],
        params["w_fc"], params["b_fc"], params["w_proj"], params["b_proj"],
    )

    # VMEM budget: double-buffered per-layer weights + pipelined activation
    # blocks + in-kernel temporaries, with headroom; capped below v7x 64 MiB.
    per_layer_w = sum(math.prod(w.shape[1:]) * w.dtype.itemsize for w in weight_args)
    act_bytes = block_b * L * D * 4
    tmp_bytes = block_b * L * (8 * D) * 4 + block_b * H * L * L * 4
    vmem_limit = min(int(2 * per_layer_w + 6 * act_bytes + 2 * tmp_bytes)
                     + (16 << 20), 60 << 20)

    cparams = pltpu.CompilerParams(
        dimension_semantics=("parallel", "arbitrary"),
        vmem_limit_bytes=vmem_limit,
    )

    in_specs = [
        pl.BlockSpec((block_b, L, D), lambda b, l: (b, 0, 0)),    # x (layer-0 only)
        pl.BlockSpec((L, D), lambda b, l: (0, 0)),                # positional emb
        pl.BlockSpec((1, 1, D), lambda b, l: (l, 0, 0)),          # ln_1 gamma
        pl.BlockSpec((1, 1, D), lambda b, l: (l, 0, 0)),          # ln_1 beta
        pl.BlockSpec((1, D, 3 * D), lambda b, l: (l, 0, 0)),      # attn in_proj W
        pl.BlockSpec((1, 1, 3 * D), lambda b, l: (l, 0, 0)),      # attn in_proj b
        pl.BlockSpec((1, D, D), lambda b, l: (l, 0, 0)),          # attn out_proj W
        pl.BlockSpec((1, 1, D), lambda b, l: (l, 0, 0)),          # attn out_proj b
        pl.BlockSpec((1, 1, D), lambda b, l: (l, 0, 0)),          # ln_2 gamma
        pl.BlockSpec((1, 1, D), lambda b, l: (l, 0, 0)),          # ln_2 beta
        pl.BlockSpec((1, D, 4 * D), lambda b, l: (l, 0, 0)),      # mlp c_fc W
        pl.BlockSpec((1, 1, 4 * D), lambda b, l: (l, 0, 0)),      # mlp c_fc b
        pl.BlockSpec((1, 4 * D, D), lambda b, l: (l, 0, 0)),      # mlp c_proj W
        pl.BlockSpec((1, 1, D), lambda b, l: (l, 0, 0)),          # mlp c_proj b
    ]

    x_out = pl.pallas_call(
        functools.partial(stack_kernel, num_heads=H),
        out_shape=jax.ShapeDtypeStruct((B, L, D), jnp.float32),
        grid=(B // block_b, n_layers),
        in_specs=in_specs,
        out_specs=pl.BlockSpec((block_b, L, D), lambda b, l: (b, 0, 0)),
        scratch_shapes=[pltpu.VMEM((block_b * L, D), jnp.float32)],
        compiler_params=cparams,
    )(x, params["pos"], *weight_args)

    # EOT gather: only B rows leave HBM; then fused ln_final + projection.
    eot = jnp.argmax(tokenized_prompts, axis=-1)
    x_eot = x_out[jnp.arange(B), eot]                             # (B, D)
    out = pl.pallas_call(
        final_kernel,
        out_shape=jax.ShapeDtypeStruct((B, E), jnp.float32),
    )(x_eot, params["lnf_g"], params["lnf_b"], params["text_projection"])
    return out


# --------------------------- pure-JAX reference ----------------------------- #

def _ln_ref(x, g, b, eps=1e-5):
    mu = x.mean(-1, keepdims=True)
    var = ((x - mu) ** 2).mean(-1, keepdims=True)
    return (x - mu) / jnp.sqrt(var + eps) * g + b


def reference_forward(x, tokenized_prompts, params):
    B, L, D = x.shape
    H = params["num_heads"]
    hd = D // H
    f32 = jnp.float32
    n_layers = params["w_qkv"].shape[0]

    x = x + params["pos"]
    mask = jnp.tril(jnp.ones((L, L), bool))
    for l in range(n_layers):
        ln1g, ln1b = params["ln1_g"][l], params["ln1_b"][l]
        wqkv, bqkv = params["w_qkv"][l].astype(f32), params["b_qkv"][l]
        wo, bo = params["w_out"][l].astype(f32), params["b_out"][l]
        ln2g, ln2b = params["ln2_g"][l], params["ln2_b"][l]
        wfc, bfc = params["w_fc"][l].astype(f32), params["b_fc"][l]
        wpr, bpr = params["w_proj"][l].astype(f32), params["b_proj"][l]

        h = _ln_ref(x, ln1g, ln1b)
        qkv = h @ wqkv + bqkv
        q, k, v = jnp.split(qkv, 3, axis=-1)
        q = q.reshape(B, L, H, hd); k = k.reshape(B, L, H, hd); v = v.reshape(B, L, H, hd)
        s = jnp.einsum('bqhd,bkhd->bhqk', q, k) / jnp.sqrt(hd)
        s = jnp.where(mask, s, -1e30)
        p = jax.nn.softmax(s, axis=-1)
        a = jnp.einsum('bhqk,bkhd->bqhd', p, v).reshape(B, L, D)
        x = x + a @ wo + bo
        h2 = _ln_ref(x, ln2g, ln2b)
        f = h2 @ wfc + bfc
        f = f * jax.nn.sigmoid(1.702 * f)
        x = x + f @ wpr + bpr
    x = _ln_ref(x, params["lnf_g"], params["lnf_b"])
    eot = jnp.argmax(tokenized_prompts, axis=-1)
    return x[jnp.arange(B), eot] @ params["text_projection"]


# ----------------------------- parameter init ------------------------------ #

def init_params(key, L, D, H, E, n_layers):
    def nrm(k, shape, scale=0.02):
        return (scale * jax.random.normal(k, shape)).astype(jnp.float32)

    keys = iter(jax.random.split(key, 8 + 12 * n_layers))
    bf16 = jnp.bfloat16

    ln1_g, ln1_b, w_qkv, b_qkv, w_out, b_out = [], [], [], [], [], []
    ln2_g, ln2_b, w_fc, b_fc, w_pr, b_pr = [], [], [], [], [], []
    for _ in range(n_layers):
        ln1_g.append(1.0 + nrm(next(keys), (1, D), 0.1))
        ln1_b.append(nrm(next(keys), (1, D), 0.1))
        w_qkv.append(nrm(next(keys), (D, 3 * D)))
        b_qkv.append(nrm(next(keys), (1, 3 * D)))
        w_out.append(nrm(next(keys), (D, D)))
        b_out.append(nrm(next(keys), (1, D)))
        ln2_g.append(1.0 + nrm(next(keys), (1, D), 0.1))
        ln2_b.append(nrm(next(keys), (1, D), 0.1))
        w_fc.append(nrm(next(keys), (D, 4 * D)))
        b_fc.append(nrm(next(keys), (1, 4 * D)))
        w_pr.append(nrm(next(keys), (4 * D, D)))
        b_pr.append(nrm(next(keys), (1, D)))

    params = {
        "num_heads": H,
        "pos": nrm(next(keys), (L, D)),
        "lnf_g": 1.0 + nrm(next(keys), (1, D), 0.1),
        "lnf_b": nrm(next(keys), (1, D), 0.1),
        "text_projection": nrm(next(keys), (D, E)),
        # stacked per-layer weights; MXU matmul weights stored in bf16
        "ln1_g": jnp.stack(ln1_g), "ln1_b": jnp.stack(ln1_b),
        "w_qkv": jnp.stack(w_qkv).astype(bf16), "b_qkv": jnp.stack(b_qkv),
        "w_out": jnp.stack(w_out).astype(bf16), "b_out": jnp.stack(b_out),
        "ln2_g": jnp.stack(ln2_g), "ln2_b": jnp.stack(ln2_b),
        "w_fc": jnp.stack(w_fc).astype(bf16), "b_fc": jnp.stack(b_fc),
        "w_proj": jnp.stack(w_pr).astype(bf16), "b_proj": jnp.stack(b_pr),
    }
    return params


# ----------------------------------- main ----------------------------------- #

if __name__ == "__main__":
    B, L, D, H, E, N_LAYERS = 2, 8, 32, 4, 16, 2

    root = jax.random.PRNGKey(0)
    k_par, k_x, k_tok = jax.random.split(root, 3)

    params = init_params(k_par, L, D, H, E, N_LAYERS)

    # prompt token embeddings (already embedded, as in CoOp-style prompt learners)
    x = (0.1 * jax.random.normal(k_x, (B, L, D))).astype(jnp.float32)

    # tokenized prompts: random ids with the EOT token (largest id) at a per-row pos
    tok = jax.random.randint(k_tok, (B, L), 1, 100, dtype=jnp.int32)
    eot_pos = jnp.array([5, 3], dtype=jnp.int32)
    tok = tok.at[jnp.arange(B), eot_pos].set(49407)

    out = text_encoder_forward(x, tok, params)
    out = jax.block_until_ready(out)

    ref = reference_forward(x, tok, params)
    assert out.shape == (B, E)
    assert jnp.allclose(out, ref, atol=5e-3, rtol=5e-3), (out, ref)

    print("KERNEL_OK")
</pallas_src>

<mosaic_0001>
module attributes {stable_mosaic.version = 11 : i64} {
  func.func @stack_kernel(%arg0: i32, %arg1: i32, %arg2: memref<1x8x32xf32, #tpu.memory_space<vmem>>, %arg3: memref<8x32xf32, #tpu.memory_space<vmem>>, %arg4: memref<1x1x32xf32, #tpu.memory_space<vmem>>, %arg5: memref<1x1x32xf32, #tpu.memory_space<vmem>>, %arg6: memref<1x32x96xbf16, #tpu.memory_space<vmem>>, %arg7: memref<1x1x96xf32, #tpu.memory_space<vmem>>, %arg8: memref<1x32x32xbf16, #tpu.memory_space<vmem>>, %arg9: memref<1x1x32xf32, #tpu.memory_space<vmem>>, %arg10: memref<1x1x32xf32, #tpu.memory_space<vmem>>, %arg11: memref<1x1x32xf32, #tpu.memory_space<vmem>>, %arg12: memref<1x32x128xbf16, #tpu.memory_space<vmem>>, %arg13: memref<1x1x128xf32, #tpu.memory_space<vmem>>, %arg14: memref<1x128x32xbf16, #tpu.memory_space<vmem>>, %arg15: memref<1x1x32xf32, #tpu.memory_space<vmem>>, %arg16: memref<1x8x32xf32, #tpu.memory_space<vmem>>, %arg17: memref<8x32xf32, #tpu.memory_space<vmem>>) attributes {dimension_semantics = [#tpu.dimension_semantics<parallel>, #tpu.dimension_semantics<arbitrary>], iteration_bounds = array<i64: 2, 2>, scalar_prefetch = 0 : i64, scratch_operands = 1 : i64, tpu.core_type = #tpu.core_type<tc>, window_params = [{transform_indices = @transform_0, window_bounds = array<i64: 1, 8, 32>}, {pipeline_mode = #tpu.pipeline_mode<synchronous>, transform_indices = @transform_1, window_bounds = array<i64: 8, 32>}, {transform_indices = @transform_2, window_bounds = array<i64: 1, 1, 32>}, {transform_indices = @transform_3, window_bounds = array<i64: 1, 1, 32>}, {transform_indices = @transform_4, window_bounds = array<i64: 1, 32, 96>}, {transform_indices = @transform_5, window_bounds = array<i64: 1, 1, 96>}, {transform_indices = @transform_6, window_bounds = array<i64: 1, 32, 32>}, {transform_indices = @transform_7, window_bounds = array<i64: 1, 1, 32>}, {transform_indices = @transform_8, window_bounds = array<i64: 1, 1, 32>}, {transform_indices = @transform_9, window_bounds = array<i64: 1, 1, 32>}, {transform_indices = @transform_10, window_bounds = array<i64: 1, 32, 128>}, {transform_indices = @transform_11, window_bounds = array<i64: 1, 1, 128>}, {transform_indices = @transform_12, window_bounds = array<i64: 1, 128, 32>}, {transform_indices = @transform_13, window_bounds = array<i64: 1, 1, 32>}, {transform_indices = @transform_14, window_bounds = array<i64: 1, 8, 32>}]} {
    %c0_i32 = arith.constant 0 : i32
    %0 = arith.cmpi eq, %arg1, %c0_i32 : i32
    %1 = arith.extui %0 : i1 to i32
    %c0_i32_0 = arith.constant 0 : i32
    %2 = arith.cmpi ne, %1, %c0_i32_0 : i32
    scf.if %2 {
      %c0_88 = arith.constant 0 : index
      %c0_89 = arith.constant 0 : index
      %c0_90 = arith.constant 0 : index
      %221 = vector.load %arg2[%c0_88, %c0_89, %c0_90] : memref<1x8x32xf32, #tpu.memory_space<vmem>>, vector<1x8x32xf32>
      %c0_91 = arith.constant 0 : index
      %c0_92 = arith.constant 0 : index
      %222 = vector.load %arg3[%c0_91, %c0_92] : memref<8x32xf32, #tpu.memory_space<vmem>>, vector<8x32xf32>
      %223 = vector.shape_cast %222 : vector<8x32xf32> to vector<1x8x32xf32>
      %224 = arith.addf %221, %223 : vector<1x8x32xf32>
      %c0_93 = arith.constant 0 : index
      %c0_94 = arith.constant 0 : index
      %c0_95 = arith.constant 0 : index
      %225 = vector.load %arg16[%c0_93, %c0_94, %c0_95] : memref<1x8x32xf32, #tpu.memory_space<vmem>>, vector<1x8x32xf32>
      tpu.vector_store %arg16[%c0_93, %c0_94, %c0_95], %224 {strides = array<i32>} : memref<1x8x32xf32, #tpu.memory_space<vmem>>, vector<1x8x32xf32>,
    } else {
    }
    %c0 = arith.constant 0 : index
    %c0_1 = arith.constant 0 : index
    %c0_2 = arith.constant 0 : index
    %3 = vector.load %arg16[%c0, %c0_1, %c0_2] : memref<1x8x32xf32, #tpu.memory_space<vmem>>, vector<1x8x32xf32>
    %4 = vector.shape_cast %3 : vector<1x8x32xf32> to vector<8x32xf32>
    %c0_3 = arith.constant 0 : index
    %c0_4 = arith.constant 0 : index
    %c0_5 = arith.constant 0 : index
    %5 = vector.load %arg4[%c0_3, %c0_4, %c0_5] : memref<1x1x32xf32, #tpu.memory_space<vmem>>, vector<1x1x32xf32>
    %6 = vector.shape_cast %5 : vector<1x1x32xf32> to vector<1x32xf32>
    %c0_6 = arith.constant 0 : index
    %c0_7 = arith.constant 0 : index
    %c0_8 = arith.constant 0 : index
    %7 = vector.load %arg5[%c0_6, %c0_7, %c0_8] : memref<1x1x32xf32, #tpu.memory_space<vmem>>, vector<1x1x32xf32>
    %8 = vector.shape_cast %7 : vector<1x1x32xf32> to vector<1x32xf32>
    %cst = arith.constant dense<0.000000e+00> : vector<8xf32>
    %9 = vector.multi_reduction <add>, %4, %cst [1] : vector<8x32xf32> to vector<8xf32>
    %10 = vector.shape_cast %9 : vector<8xf32> to vector<8x1xf32>
    %cst_9 = arith.constant 3.200000e+01 : f32
    %11 = vector.broadcast %cst_9 : f32 to vector<8x1xf32>
    %12 = arith.divf %10, %11 : vector<8x1xf32>
    %13 = vector.broadcast %12 : vector<8x1xf32> to vector<8x32xf32>
    %14 = arith.subf %4, %13 : vector<8x32xf32>
    %15 = arith.mulf %14, %14 : vector<8x32xf32>
    %cst_10 = arith.constant dense<0.000000e+00> : vector<8xf32>
    %16 = vector.multi_reduction <add>, %15, %cst_10 [1] : vector<8x32xf32> to vector<8xf32>
    %17 = vector.shape_cast %16 : vector<8xf32> to vector<8x1xf32>
    %cst_11 = arith.constant 3.200000e+01 : f32
    %18 = vector.broadcast %cst_11 : f32 to vector<8x1xf32>
    %19 = arith.divf %17, %18 : vector<8x1xf32>
    %20 = vector.broadcast %12 : vector<8x1xf32> to vector<8x32xf32>
    %21 = arith.subf %4, %20 : vector<8x32xf32>
    %cst_12 = arith.constant 9.99999974E-6 : f32
    %22 = vector.broadcast %cst_12 : f32 to vector<8x1xf32>
    %23 = arith.addf %19, %22 : vector<8x1xf32>
    %24 = math.rsqrt %23 : vector<8x1xf32>
    %25 = vector.broadcast %24 : vector<8x1xf32> to vector<8x32xf32>
    %26 = arith.mulf %21, %25 : vector<8x32xf32>
    %27 = vector.broadcast %6 : vector<1x32xf32> to vector<8x32xf32>
    %28 = arith.mulf %26, %27 : vector<8x32xf32>
    %29 = vector.broadcast %8 : vector<1x32xf32> to vector<8x32xf32>
    %30 = arith.addf %28, %29 : vector<8x32xf32>
    %31 = arith.truncf %30 : vector<8x32xf32> to vector<8x32xbf16>
    %c0_13 = arith.constant 0 : index
    %c0_14 = arith.constant 0 : index
    %c0_15 = arith.constant 0 : index
    %32 = vector.load %arg6[%c0_13, %c0_14, %c0_15] : memref<1x32x96xbf16, #tpu.memory_space<vmem>>, vector<1x32x96xbf16>
    %33 = vector.shape_cast %32 : vector<1x32x96xbf16> to vector<32x96xbf16>
    %cst_16 = arith.constant dense<0.000000e+00> : vector<8x96xf32>
    %34 = tpu.matmul %31, %33, %cst_16 {dimension_numbers = #tpu.dot_dimension_numbers<[1], [0], [0], [1], [0, 0, 1, 1], [], []>} : vector<8x32xbf16>, vector<32x96xbf16>, vector<8x96xf32> -> vector<8x96xf32>
    %c0_17 = arith.constant 0 : index
    %c0_18 = arith.constant 0 : index
    %c0_19 = arith.constant 0 : index
    %35 = vector.load %arg7[%c0_17, %c0_18, %c0_19] : memref<1x1x96xf32, #tpu.memory_space<vmem>>, vector<1x1x96xf32>
    %36 = vector.shape_cast %35 : vector<1x1x96xf32> to vector<1x96xf32>
    %37 = vector.broadcast %36 : vector<1x96xf32> to vector<8x96xf32>
    %38 = arith.addf %34, %37 : vector<8x96xf32>
    %39 = vector.extract_strided_slice %38 {offsets = [0, 0], sizes = [8, 32], strides = [1, 1]} : vector<8x96xf32> to vector<8x32xf32>
    %40 = vector.extract_strided_slice %38 {offsets = [0, 32], sizes = [8, 32], strides = [1, 1]} : vector<8x96xf32> to vector<8x32xf32>
    %41 = vector.extract_strided_slice %38 {offsets = [0, 64], sizes = [8, 32], strides = [1, 1]} : vector<8x96xf32> to vector<8x32xf32>
    %42 = tpu.iota {dimensions = array<i32: 0>} : vector<8x8xi32>
    %43 = tpu.iota {dimensions = array<i32: 1>} : vector<8x8xi32>
    %44 = arith.cmpi sle, %43, %42 : vector<8x8xi32>
    %45 = vector.shape_cast %44 : vector<8x8xi1> to vector<1x8x8xi1>
    %46 = vector.extract_strided_slice %39 {offsets = [0, 0], sizes = [8, 8], strides = [1, 1]} : vector<8x32xf32> to vector<8x8xf32>
    %47 = vector.shape_cast %46 : vector<8x8xf32> to vector<1x8x8xf32>
    %48 = arith.truncf %47 : vector<1x8x8xf32> to vector<1x8x8xbf16>
    %49 = vector.extract_strided_slice %40 {offsets = [0, 0], sizes = [8, 8], strides = [1, 1]} : vector<8x32xf32> to vector<8x8xf32>
    %50 = vector.shape_cast %49 : vector<8x8xf32> to vector<1x8x8xf32>
    %51 = arith.truncf %50 : vector<1x8x8xf32> to vector<1x8x8xbf16>
    %52 = vector.extract_strided_slice %41 {offsets = [0, 0], sizes = [8, 8], strides = [1, 1]} : vector<8x32xf32> to vector<8x8xf32>
    %53 = vector.shape_cast %52 : vector<8x8xf32> to vector<1x8x8xf32>
    %54 = arith.truncf %53 : vector<1x8x8xf32> to vector<1x8x8xbf16>
    "tpu.trace_start"() <{level = 10 : i32, message = "bqd,bkd->bqk"}> : () -> ()
    %cst_20 = arith.constant dense<0.000000e+00> : vector<1x8x8xf32>
    %55 = tpu.matmul %48, %51, %cst_20 {dimension_numbers = #tpu.dot_dimension_numbers<[2], [2], [1], [1], [0, 0, 0, 1, 1, 1], [0], [0]>} : vector<1x8x8xbf16>, vector<1x8x8xbf16>, vector<1x8x8xf32> -> vector<1x8x8xf32>
    "tpu.trace_stop"() : () -> ()
    %cst_21 = arith.constant 0.353553385 : f32
    %56 = vector.broadcast %cst_21 : f32 to vector<1x8x8xf32>
    %57 = arith.mulf %55, %56 : vector<1x8x8xf32>
    %cst_22 = arith.constant -1.000000e+30 : f32
    %58 = vector.broadcast %cst_22 : f32 to vector<1x8x8xf32>
    %59 = arith.select %45, %57, %58 : vector<1x8x8xi1>, vector<1x8x8xf32>
    %cst_23 = arith.constant dense<0xFF800000> : vector<1x8xf32>
    %60 = vector.multi_reduction <maximumf>, %59, %cst_23 [2] : vector<1x8x8xf32> to vector<1x8xf32>
    %61 = vector.shape_cast %60 : vector<1x8xf32> to vector<1x8x1xf32>
    %62 = vector.broadcast %61 : vector<1x8x1xf32> to vector<1x8x8xf32>
    %63 = arith.subf %59, %62 : vector<1x8x8xf32>
    %64 = math.exp %63 : vector<1x8x8xf32>
    %cst_24 = arith.constant dense<0.000000e+00> : vector<1x8xf32>
    %65 = vector.multi_reduction <add>, %64, %cst_24 [2] : vector<1x8x8xf32> to vector<1x8xf32>
    %66 = vector.shape_cast %65 : vector<1x8xf32> to vector<1x8x1xf32>
    %67 = tpu.reciprocal %66 {approx = true} : vector<1x8x1xf32> -> vector<1x8x1xf32>
    %68 = vector.broadcast %67 : vector<1x8x1xf32> to vector<1x8x8xf32>
    %69 = arith.mulf %64, %68 : vector<1x8x8xf32>
    %70 = arith.truncf %69 : vector<1x8x8xf32> to vector<1x8x8xbf16>
    "tpu.trace_start"() <{level = 10 : i32, message = "bqk,bkd->bqd"}> : () -> ()
    %cst_25 = arith.constant dense<0.000000e+00> : vector<1x8x8xf32>
    %71 = tpu.matmul %70, %54, %cst_25 {dimension_numbers = #tpu.dot_dimension_numbers<[2], [1], [1], [2], [0, 0, 0, 1, 1, 2], [0], [0]>} : vector<1x8x8xbf16>, vector<1x8x8xbf16>, vector<1x8x8xf32> -> vector<1x8x8xf32>
    "tpu.trace_stop"() : () -> ()
    %72 = vector.shape_cast %71 : vector<1x8x8xf32> to vector<8x8xf32>
    %c0_26 = arith.constant 0 : index
    %c0_27 = arith.constant 0 : index
    %73 = vector.load %arg17[%c0_26, %c0_27] : memref<8x32xf32, #tpu.memory_space<vmem>>, vector<8x8xf32>
    tpu.vector_store %arg17[%c0_26, %c0_27], %72 {strides = array<i32>} : memref<8x32xf32, #tpu.memory_space<vmem>>, vector<8x8xf32>,
    %74 = vector.extract_strided_slice %39 {offsets = [0, 8], sizes = [8, 8], strides = [1, 1]} : vector<8x32xf32> to vector<8x8xf32>
    %75 = vector.shape_cast %74 : vector<8x8xf32> to vector<1x8x8xf32>
    %76 = arith.truncf %75 : vector<1x8x8xf32> to vector<1x8x8xbf16>
    %77 = vector.extract_strided_slice %40 {offsets = [0, 8], sizes = [8, 8], strides = [1, 1]} : vector<8x32xf32> to vector<8x8xf32>
    %78 = vector.shape_cast %77 : vector<8x8xf32> to vector<1x8x8xf32>
    %79 = arith.truncf %78 : vector<1x8x8xf32> to vector<1x8x8xbf16>
    %80 = vector.extract_strided_slice %41 {offsets = [0, 8], sizes = [8, 8], strides = [1, 1]} : vector<8x32xf32> to vector<8x8xf32>
    %81 = vector.shape_cast %80 : vector<8x8xf32> to vector<1x8x8xf32>
    %82 = arith.truncf %81 : vector<1x8x8xf32> to vector<1x8x8xbf16>
    "tpu.trace_start"() <{level = 10 : i32, message = "bqd,bkd->bqk"}> : () -> ()
    %cst_28 = arith.constant dense<0.000000e+00> : vector<1x8x8xf32>
    %83 = tpu.matmul %76, %79, %cst_28 {dimension_numbers = #tpu.dot_dimension_numbers<[2], [2], [1], [1], [0, 0, 0, 1, 1, 1], [0], [0]>} : vector<1x8x8xbf16>, vector<1x8x8xbf16>, vector<1x8x8xf32> -> vector<1x8x8xf32>
    "tpu.trace_stop"() : () -> ()
    %cst_29 = arith.constant 0.353553385 : f32
    %84 = vector.broadcast %cst_29 : f32 to vector<1x8x8xf32>
    %85 = arith.mulf %83, %84 : vector<1x8x8xf32>
    %cst_30 = arith.constant -1.000000e+30 : f32
    %86 = vector.broadcast %cst_30 : f32 to vector<1x8x8xf32>
    %87 = arith.select %45, %85, %86 : vector<1x8x8xi1>, vector<1x8x8xf32>
    %cst_31 = arith.constant dense<0xFF800000> : vector<1x8xf32>
    %88 = vector.multi_reduction <maximumf>, %87, %cst_31 [2] : vector<1x8x8xf32> to vector<1x8xf32>
    %89 = vector.shape_cast %88 : vector<1x8xf32> to vector<1x8x1xf32>
    %90 = vector.broadcast %89 : vector<1x8x1xf32> to vector<1x8x8xf32>
    %91 = arith.subf %87, %90 : vector<1x8x8xf32>
    %92 = math.exp %91 : vector<1x8x8xf32>
    %cst_32 = arith.constant dense<0.000000e+00> : vector<1x8xf32>
    %93 = vector.multi_reduction <add>, %92, %cst_32 [2] : vector<1x8x8xf32> to vector<1x8xf32>
    %94 = vector.shape_cast %93 : vector<1x8xf32> to vector<1x8x1xf32>
    %95 = tpu.reciprocal %94 {approx = true} : vector<1x8x1xf32> -> vector<1x8x1xf32>
    %96 = vector.broadcast %95 : vector<1x8x1xf32> to vector<1x8x8xf32>
    %97 = arith.mulf %92, %96 : vector<1x8x8xf32>
    %98 = arith.truncf %97 : vector<1x8x8xf32> to vector<1x8x8xbf16>
    "tpu.trace_start"() <{level = 10 : i32, message = "bqk,bkd->bqd"}> : () -> ()
    %cst_33 = arith.constant dense<0.000000e+00> : vector<1x8x8xf32>
    %99 = tpu.matmul %98, %82, %cst_33 {dimension_numbers = #tpu.dot_dimension_numbers<[2], [1], [1], [2], [0, 0, 0, 1, 1, 2], [0], [0]>} : vector<1x8x8xbf16>, vector<1x8x8xbf16>, vector<1x8x8xf32> -> vector<1x8x8xf32>
    "tpu.trace_stop"() : () -> ()
    %100 = vector.shape_cast %99 : vector<1x8x8xf32> to vector<8x8xf32>
    %c0_34 = arith.constant 0 : index
    %c8 = arith.constant 8 : index
    %101 = vector.load %arg17[%c0_34, %c8] : memref<8x32xf32, #tpu.memory_space<vmem>>, vector<8x8xf32>
    tpu.vector_store %arg17[%c0_34, %c8], %100 {strides = array<i32>} : memref<8x32xf32, #tpu.memory_space<vmem>>, vector<8x8xf32>,
    %102 = vector.extract_strided_slice %39 {offsets = [0, 16], sizes = [8, 8], strides = [1, 1]} : vector<8x32xf32> to vector<8x8xf32>
    %103 = vector.shape_cast %102 : vector<8x8xf32> to vector<1x8x8xf32>
    %104 = arith.truncf %103 : vector<1x8x8xf32> to vector<1x8x8xbf16>
    %105 = vector.extract_strided_slice %40 {offsets = [0, 16], sizes = [8, 8], strides = [1, 1]} : vector<8x32xf32> to vector<8x8xf32>
    %106 = vector.shape_cast %105 : vector<8x8xf32> to vector<1x8x8xf32>
    %107 = arith.truncf %106 : vector<1x8x8xf32> to vector<1x8x8xbf16>
    %108 = vector.extract_strided_slice %41 {offsets = [0, 16], sizes = [8, 8], strides = [1, 1]} : vector<8x32xf32> to vector<8x8xf32>
    %109 = vector.shape_cast %108 : vector<8x8xf32> to vector<1x8x8xf32>
    %110 = arith.truncf %109 : vector<1x8x8xf32> to vector<1x8x8xbf16>
    "tpu.trace_start"() <{level = 10 : i32, message = "bqd,bkd->bqk"}> : () -> ()
    %cst_35 = arith.constant dense<0.000000e+00> : vector<1x8x8xf32>
    %111 = tpu.matmul %104, %107, %cst_35 {dimension_numbers = #tpu.dot_dimension_numbers<[2], [2], [1], [1], [0, 0, 0, 1, 1, 1], [0], [0]>} : vector<1x8x8xbf16>, vector<1x8x8xbf16>, vector<1x8x8xf32> -> vector<1x8x8xf32>
    "tpu.trace_stop"() : () -> ()
    %cst_36 = arith.constant 0.353553385 : f32
    %112 = vector.broadcast %cst_36 : f32 to vector<1x8x8xf32>
    %113 = arith.mulf %111, %112 : vector<1x8x8xf32>
    %cst_37 = arith.constant -1.000000e+30 : f32
    %114 = vector.broadcast %cst_37 : f32 to vector<1x8x8xf32>
    %115 = arith.select %45, %113, %114 : vector<1x8x8xi1>, vector<1x8x8xf32>
    %cst_38 = arith.constant dense<0xFF800000> : vector<1x8xf32>
    %116 = vector.multi_reduction <maximumf>, %115, %cst_38 [2] : vector<1x8x8xf32> to vector<1x8xf32>
    %117 = vector.shape_cast %116 : vector<1x8xf32> to vector<1x8x1xf32>
    %118 = vector.broadcast %117 : vector<1x8x1xf32> to vector<1x8x8xf32>
    %119 = arith.subf %115, %118 : vector<1x8x8xf32>
    %120 = math.exp %119 : vector<1x8x8xf32>
    %cst_39 = arith.constant dense<0.000000e+00> : vector<1x8xf32>
    %121 = vector.multi_reduction <add>, %120, %cst_39 [2] : vector<1x8x8xf32> to vector<1x8xf32>
    %122 = vector.shape_cast %121 : vector<1x8xf32> to vector<1x8x1xf32>
    %123 = tpu.reciprocal %122 {approx = true} : vector<1x8x1xf32> -> vector<1x8x1xf32>
    %124 = vector.broadcast %123 : vector<1x8x1xf32> to vector<1x8x8xf32>
    %125 = arith.mulf %120, %124 : vector<1x8x8xf32>
    %126 = arith.truncf %125 : vector<1x8x8xf32> to vector<1x8x8xbf16>
    "tpu.trace_start"() <{level = 10 : i32, message = "bqk,bkd->bqd"}> : () -> ()
    %cst_40 = arith.constant dense<0.000000e+00> : vector<1x8x8xf32>
    %127 = tpu.matmul %126, %110, %cst_40 {dimension_numbers = #tpu.dot_dimension_numbers<[2], [1], [1], [2], [0, 0, 0, 1, 1, 2], [0], [0]>} : vector<1x8x8xbf16>, vector<1x8x8xbf16>, vector<1x8x8xf32> -> vector<1x8x8xf32>
    "tpu.trace_stop"() : () -> ()
    %128 = vector.shape_cast %127 : vector<1x8x8xf32> to vector<8x8xf32>
    %c0_41 = arith.constant 0 : index
    %c16 = arith.constant 16 : index
    %129 = vector.load %arg17[%c0_41, %c16] : memref<8x32xf32, #tpu.memory_space<vmem>>, vector<8x8xf32>
    tpu.vector_store %arg17[%c0_41, %c16], %128 {strides = array<i32>} : memref<8x32xf32, #tpu.memory_space<vmem>>, vector<8x8xf32>,
    %130 = vector.extract_strided_slice %39 {offsets = [0, 24], sizes = [8, 8], strides = [1, 1]} : vector<8x32xf32> to vector<8x8xf32>
    %131 = vector.shape_cast %130 : vector<8x8xf32> to vector<1x8x8xf32>
    %132 = arith.truncf %131 : vector<1x8x8xf32> to vector<1x8x8xbf16>
    %133 = vector.extract_strided_slice %40 {offsets = [0, 24], sizes = [8, 8], strides = [1, 1]} : vector<8x32xf32> to vector<8x8xf32>
    %134 = vector.shape_cast %133 : vector<8x8xf32> to vector<1x8x8xf32>
    %135 = arith.truncf %134 : vector<1x8x8xf32> to vector<1x8x8xbf16>
    %136 = vector.extract_strided_slice %41 {offsets = [0, 24], sizes = [8, 8], strides = [1, 1]} : vector<8x32xf32> to vector<8x8xf32>
    %137 = vector.shape_cast %136 : vector<8x8xf32> to vector<1x8x8xf32>
    %138 = arith.truncf %137 : vector<1x8x8xf32> to vector<1x8x8xbf16>
    "tpu.trace_start"() <{level = 10 : i32, message = "bqd,bkd->bqk"}> : () -> ()
    %cst_42 = arith.constant dense<0.000000e+00> : vector<1x8x8xf32>
    %139 = tpu.matmul %132, %135, %cst_42 {dimension_numbers = #tpu.dot_dimension_numbers<[2], [2], [1], [1], [0, 0, 0, 1, 1, 1], [0], [0]>} : vector<1x8x8xbf16>, vector<1x8x8xbf16>, vector<1x8x8xf32> -> vector<1x8x8xf32>
    "tpu.trace_stop"() : () -> ()
    %cst_43 = arith.constant 0.353553385 : f32
    %140 = vector.broadcast %cst_43 : f32 to vector<1x8x8xf32>
    %141 = arith.mulf %139, %140 : vector<1x8x8xf32>
    %cst_44 = arith.constant -1.000000e+30 : f32
    %142 = vector.broadcast %cst_44 : f32 to vector<1x8x8xf32>
    %143 = arith.select %45, %141, %142 : vector<1x8x8xi1>, vector<1x8x8xf32>
    %cst_45 = arith.constant dense<0xFF800000> : vector<1x8xf32>
    %144 = vector.multi_reduction <maximumf>, %143, %cst_45 [2] : vector<1x8x8xf32> to vector<1x8xf32>
    %145 = vector.shape_cast %144 : vector<1x8xf32> to vector<1x8x1xf32>
    %146 = vector.broadcast %145 : vector<1x8x1xf32> to vector<1x8x8xf32>
    %147 = arith.subf %143, %146 : vector<1x8x8xf32>
    %148 = math.exp %147 : vector<1x8x8xf32>
    %cst_46 = arith.constant dense<0.000000e+00> : vector<1x8xf32>
    %149 = vector.multi_reduction <add>, %148, %cst_46 [2] : vector<1x8x8xf32> to vector<1x8xf32>
    %150 = vector.shape_cast %149 : vector<1x8xf32> to vector<1x8x1xf32>
    %151 = tpu.reciprocal %150 {approx = true} : vector<1x8x1xf32> -> vector<1x8x1xf32>
    %152 = vector.broadcast %151 : vector<1x8x1xf32> to vector<1x8x8xf32>
    %153 = arith.mulf %148, %152 : vector<1x8x8xf32>
    %154 = arith.truncf %153 : vector<1x8x8xf32> to vector<1x8x8xbf16>
    "tpu.trace_start"() <{level = 10 : i32, message = "bqk,bkd->bqd"}> : () -> ()
    %cst_47 = arith.constant dense<0.000000e+00> : vector<1x8x8xf32>
    %155 = tpu.matmul %154, %138, %cst_47 {dimension_numbers = #tpu.dot_dimension_numbers<[2], [1], [1], [2], [0, 0, 0, 1, 1, 2], [0], [0]>} : vector<1x8x8xbf16>, vector<1x8x8xbf16>, vector<1x8x8xf32> -> vector<1x8x8xf32>
    "tpu.trace_stop"() : () -> ()
    %156 = vector.shape_cast %155 : vector<1x8x8xf32> to vector<8x8xf32>
    %c0_48 = arith.constant 0 : index
    %c24 = arith.constant 24 : index
    %157 = vector.load %arg17[%c0_48, %c24] : memref<8x32xf32, #tpu.memory_space<vmem>>, vector<8x8xf32>
    tpu.vector_store %arg17[%c0_48, %c24], %156 {strides = array<i32>} : memref<8x32xf32, #tpu.memory_space<vmem>>, vector<8x8xf32>,
    %c0_49 = arith.constant 0 : index
    %c0_50 = arith.constant 0 : index
    %158 = vector.load %arg17[%c0_49, %c0_50] : memref<8x32xf32, #tpu.memory_space<vmem>>, vector<8x32xf32>
    %159 = arith.truncf %158 : vector<8x32xf32> to vector<8x32xbf16>
    %c0_51 = arith.constant 0 : index
    %c0_52 = arith.constant 0 : index
    %c0_53 = arith.constant 0 : index
    %160 = vector.load %arg8[%c0_51, %c0_52, %c0_53] : memref<1x32x32xbf16, #tpu.memory_space<vmem>>, vector<1x32x32xbf16>
    %161 = vector.shape_cast %160 : vector<1x32x32xbf16> to vector<32x32xbf16>
    %cst_54 = arith.constant dense<0.000000e+00> : vector<8x32xf32>
    %162 = tpu.matmul %159, %161, %cst_54 {dimension_numbers = #tpu.dot_dimension_numbers<[1], [0], [0], [1], [0, 0, 1, 1], [], []>} : vector<8x32xbf16>, vector<32x32xbf16>, vector<8x32xf32> -> vector<8x32xf32>
    %c0_55 = arith.constant 0 : index
    %c0_56 = arith.constant 0 : index
    %c0_57 = arith.constant 0 : index
    %163 = vector.load %arg9[%c0_55, %c0_56, %c0_57] : memref<1x1x32xf32, #tpu.memory_space<vmem>>, vector<1x1x32xf32>
    %164 = vector.shape_cast %163 : vector<1x1x32xf32> to vector<1x32xf32>
    %165 = vector.broadcast %164 : vector<1x32xf32> to vector<8x32xf32>
    %166 = arith.addf %162, %165 : vector<8x32xf32>
    %167 = arith.addf %4, %166 : vector<8x32xf32>
    %c0_58 = arith.constant 0 : index
    %c0_59 = arith.constant 0 : index
    %c0_60 = arith.constant 0 : index
    %168 = vector.load %arg10[%c0_58, %c0_59, %c0_60] : memref<1x1x32xf32, #tpu.memory_space<vmem>>, vector<1x1x32xf32>
    %169 = vector.shape_cast %168 : vector<1x1x32xf32> to vector<1x32xf32>
    %c0_61 = arith.constant 0 : index
    %c0_62 = arith.constant 0 : index
    %c0_63 = arith.constant 0 : index
    %170 = vector.load %arg11[%c0_61, %c0_62, %c0_63] : memref<1x1x32xf32, #tpu.memory_space<vmem>>, vector<1x1x32xf32>
    %171 = vector.shape_cast %170 : vector<1x1x32xf32> to vector<1x32xf32>
    %cst_64 = arith.constant dense<0.000000e+00> : vector<8xf32>
    %172 = vector.multi_reduction <add>, %167, %cst_64 [1] : vector<8x32xf32> to vector<8xf32>
    %173 = vector.shape_cast %172 : vector<8xf32> to vector<8x1xf32>
    %cst_65 = arith.constant 3.200000e+01 : f32
    %174 = vector.broadcast %cst_65 : f32 to vector<8x1xf32>
    %175 = arith.divf %173, %174 : vector<8x1xf32>
    %176 = vector.broadcast %175 : vector<8x1xf32> to vector<8x32xf32>
    %177 = arith.subf %167, %176 : vector<8x32xf32>
    %178 = arith.mulf %177, %177 : vector<8x32xf32>
    %cst_66 = arith.constant dense<0.000000e+00> : vector<8xf32>
    %179 = vector.multi_reduction <add>, %178, %cst_66 [1] : vector<8x32xf32> to vector<8xf32>
    %180 = vector.shape_cast %179 : vector<8xf32> to vector<8x1xf32>
    %cst_67 = arith.constant 3.200000e+01 : f32
    %181 = vector.broadcast %cst_67 : f32 to vector<8x1xf32>
    %182 = arith.divf %180, %181 : vector<8x1xf32>
    %183 = vector.broadcast %175 : vector<8x1xf32> to vector<8x32xf32>
    %184 = arith.subf %167, %183 : vector<8x32xf32>
    %cst_68 = arith.constant 9.99999974E-6 : f32
    %185 = vector.broadcast %cst_68 : f32 to vector<8x1xf32>
    %186 = arith.addf %182, %185 : vector<8x1xf32>
    %187 = math.rsqrt %186 : vector<8x1xf32>
    %188 = vector.broadcast %187 : vector<8x1xf32> to vector<8x32xf32>
    %189 = arith.mulf %184, %188 : vector<8x32xf32>
    %190 = vector.broadcast %169 : vector<1x32xf32> to vector<8x32xf32>
    %191 = arith.mulf %189, %190 : vector<8x32xf32>
    %192 = vector.broadcast %171 : vector<1x32xf32> to vector<8x32xf32>
    %193 = arith.addf %191, %192 : vector<8x32xf32>
    %194 = arith.truncf %193 : vector<8x32xf32> to vector<8x32xbf16>
    %c0_69 = arith.constant 0 : index
    %c0_70 = arith.constant 0 : index
    %c0_71 = arith.constant 0 : index
    %195 = vector.load %arg12[%c0_69, %c0_70, %c0_71] : memref<1x32x128xbf16, #tpu.memory_space<vmem>>, vector<1x32x128xbf16>
    %196 = vector.shape_cast %195 : vector<1x32x128xbf16> to vector<32x128xbf16>
    %cst_72 = arith.constant dense<0.000000e+00> : vector<8x128xf32>
    %197 = tpu.matmul %194, %196, %cst_72 {dimension_numbers = #tpu.dot_dimension_numbers<[1], [0], [0], [1], [0, 0, 1, 1], [], []>} : vector<8x32xbf16>, vector<32x128xbf16>, vector<8x128xf32> -> vector<8x128xf32>
    %c0_73 = arith.constant 0 : index
    %c0_74 = arith.constant 0 : index
    %c0_75 = arith.constant 0 : index
    %198 = vector.load %arg13[%c0_73, %c0_74, %c0_75] : memref<1x1x128xf32, #tpu.memory_space<vmem>>, vector<1x1x128xf32>
    %199 = vector.shape_cast %198 : vector<1x1x128xf32> to vector<1x128xf32>
    %200 = vector.broadcast %199 : vector<1x128xf32> to vector<8x128xf32>
    %201 = arith.addf %197, %200 : vector<8x128xf32>
    %cst_76 = arith.constant 1.702000e+00 : f32
    %202 = vector.broadcast %cst_76 : f32 to vector<8x128xf32>
    %203 = arith.mulf %202, %201 : vector<8x128xf32>
    %204 = arith.negf %203 : vector<8x128xf32>
    %205 = math.exp %204 : vector<8x128xf32>
    %cst_77 = arith.constant 1.000000e+00 : f32
    %206 = vector.broadcast %cst_77 : f32 to vector<8x128xf32>
    %207 = arith.addf %206, %205 : vector<8x128xf32>
    %208 = arith.divf %206, %207 : vector<8x128xf32>
    %209 = arith.mulf %201, %208 : vector<8x128xf32>
    %210 = arith.truncf %209 : vector<8x128xf32> to vector<8x128xbf16>
    %c0_78 = arith.constant 0 : index
    %c0_79 = arith.constant 0 : index
    %c0_80 = arith.constant 0 : index
    %211 = vector.load %arg14[%c0_78, %c0_79, %c0_80] : memref<1x128x32xbf16, #tpu.memory_space<vmem>>, vector<1x128x32xbf16>
    %212 = vector.shape_cast %211 : vector<1x128x32xbf16> to vector<128x32xbf16>
    %cst_81 = arith.constant dense<0.000000e+00> : vector<8x32xf32>
    %213 = tpu.matmul %210, %212, %cst_81 {dimension_numbers = #tpu.dot_dimension_numbers<[1], [0], [0], [1], [0, 0, 1, 1], [], []>} : vector<8x128xbf16>, vector<128x32xbf16>, vector<8x32xf32> -> vector<8x32xf32>
    %c0_82 = arith.constant 0 : index
    %c0_83 = arith.constant 0 : index
    %c0_84 = arith.constant 0 : index
    %214 = vector.load %arg15[%c0_82, %c0_83, %c0_84] : memref<1x1x32xf32, #tpu.memory_space<vmem>>, vector<1x1x32xf32>
    %215 = vector.shape_cast %214 : vector<1x1x32xf32> to vector<1x32xf32>
    %216 = vector.broadcast %215 : vector<1x32xf32> to vector<8x32xf32>
    %217 = arith.addf %213, %216 : vector<8x32xf32>
    %218 = arith.addf %167, %217 : vector<8x32xf32>
    %219 = vector.shape_cast %218 : vector<8x32xf32> to vector<1x8x32xf32>
    %c0_85 = arith.constant 0 : index
    %c0_86 = arith.constant 0 : index
    %c0_87 = arith.constant 0 : index
    %220 = vector.load %arg16[%c0_85, %c0_86, %c0_87] : memref<1x8x32xf32, #tpu.memory_space<vmem>>, vector<1x8x32xf32>
    tpu.vector_store %arg16[%c0_85, %c0_86, %c0_87], %219 {strides = array<i32>} : memref<1x8x32xf32, #tpu.memory_space<vmem>>, vector<1x8x32xf32>,
    return
  }
  func.func @transform_0(%arg0: i32, %arg1: i32) -> (i32, i32, i32) {
    %c0_i32 = arith.constant 0 : i32
    %c0_i32_0 = arith.constant 0 : i32
    %c0_i32_1 = arith.constant 0 : i32
    return %arg0, %c0_i32, %c0_i32_0 : i32, i32, i32
  }
  func.func @transform_1(%arg0: i32, %arg1: i32) -> (i32, i32) {
    %c0_i32 = arith.constant 0 : i32
    %c0_i32_0 = arith.constant 0 : i32
    %c0_i32_1 = arith.constant 0 : i32
    return %c0_i32, %c0_i32_0 : i32, i32
  }
  func.func @transform_2(%arg0: i32, %arg1: i32) -> (i32, i32, i32) {
    %c0_i32 = arith.constant 0 : i32
    %c0_i32_0 = arith.constant 0 : i32
    %c0_i32_1 = arith.constant 0 : i32
    return %arg1, %c0_i32, %c0_i32_0 : i32, i32, i32
  }
  func.func @transform_3(%arg0: i32, %arg1: i32) -> (i32, i32, i32) {
    %c0_i32 = arith.constant 0 : i32
    %c0_i32_0 = arith.constant 0 : i32
    %c0_i32_1 = arith.constant 0 : i32
    return %arg1, %c0_i32, %c0_i32_0 : i32, i32, i32
  }
  func.func @transform_4(%arg0: i32, %arg1: i32) -> (i32, i32, i32) {
    %c0_i32 = arith.constant 0 : i32
    %c0_i32_0 = arith.constant 0 : i32
    %c0_i32_1 = arith.constant 0 : i32
    return %arg1, %c0_i32, %c0_i32_0 : i32, i32, i32
  }
  func.func @transform_5(%arg0: i32, %arg1: i32) -> (i32, i32, i32) {
    %c0_i32 = arith.constant 0 : i32
    %c0_i32_0 = arith.constant 0 : i32
    %c0_i32_1 = arith.constant 0 : i32
    return %arg1, %c0_i32, %c0_i32_0 : i32, i32, i32
  }
  func.func @transform_6(%arg0: i32, %arg1: i32) -> (i32, i32, i32) {
    %c0_i32 = arith.constant 0 : i32
    %c0_i32_0 = arith.constant 0 : i32
    %c0_i32_1 = arith.constant 0 : i32
    return %arg1, %c0_i32, %c0_i32_0 : i32, i32, i32
  }
  func.func @transform_7(%arg0: i32, %arg1: i32) -> (i32, i32, i32) {
    %c0_i32 = arith.constant 0 : i32
    %c0_i32_0 = arith.constant 0 : i32
    %c0_i32_1 = arith.constant 0 : i32
    return %arg1, %c0_i32, %c0_i32_0 : i32, i32, i32
  }
  func.func @transform_8(%arg0: i32, %arg1: i32) -> (i32, i32, i32) {
    %c0_i32 = arith.constant 0 : i32
    %c0_i32_0 = arith.constant 0 : i32
    %c0_i32_1 = arith.constant 0 : i32
    return %arg1, %c0_i32, %c0_i32_0 : i32, i32, i32
  }
  func.func @transform_9(%arg0: i32, %arg1: i32) -> (i32, i32, i32) {
    %c0_i32 = arith.constant 0 : i32
    %c0_i32_0 = arith.constant 0 : i32
    %c0_i32_1 = arith.constant 0 : i32
    return %arg1, %c0_i32, %c0_i32_0 : i32, i32, i32
  }
  func.func @transform_10(%arg0: i32, %arg1: i32) -> (i32, i32, i32) {
    %c0_i32 = arith.constant 0 : i32
    %c0_i32_0 = arith.constant 0 : i32
    %c0_i32_1 = arith.constant 0 : i32
    return %arg1, %c0_i32, %c0_i32_0 : i32, i32, i32
  }
  func.func @transform_11(%arg0: i32, %arg1: i32) -> (i32, i32, i32) {
    %c0_i32 = arith.constant 0 : i32
    %c0_i32_0 = arith.constant 0 : i32
    %c0_i32_1 = arith.constant 0 : i32
    return %arg1, %c0_i32, %c0_i32_0 : i32, i32, i32
  }
  func.func @transform_12(%arg0: i32, %arg1: i32) -> (i32, i32, i32) {
    %c0_i32 = arith.constant 0 : i32
    %c0_i32_0 = arith.constant 0 : i32
    %c0_i32_1 = arith.constant 0 : i32
    return %arg1, %c0_i32, %c0_i32_0 : i32, i32, i32
  }
  func.func @transform_13(%arg0: i32, %arg1: i32) -> (i32, i32, i32) {
    %c0_i32 = arith.constant 0 : i32
    %c0_i32_0 = arith.constant 0 : i32
    %c0_i32_1 = arith.constant 0 : i32
    return %arg1, %c0_i32, %c0_i32_0 : i32, i32, i32
  }
  func.func @transform_14(%arg0: i32, %arg1: i32) -> (i32, i32, i32) {
    %c0_i32 = arith.constant 0 : i32
    %c0_i32_0 = arith.constant 0 : i32
    %c0_i32_1 = arith.constant 0 : i32
    return %arg0, %c0_i32, %c0_i32_0 : i32, i32, i32
  }
}

</mosaic_0001>

<llo_original>
// kernel: tpu_custom_call.1
$region0: #{tpu_custom_call.1}
  #allocation0 [shape = 'u32[]', space=smem, size = 0x4, offset = 0x4, fixed_abs, tag = 'smem constant byte address 0x4 - core index']
  #allocation1 [shape = 'u32[72,128]{1,0:T(1,128)}', space=vmem, size = 0x9000, scoped, tag = 'internal scratch']
  #allocation2 [shape = 'f32[8,32]{1,0:T(8,128)}', space=vmem, size = 0x1000, scoped, tag = 'scratch operand']
  %s0 = inlined_call_operand.vmem [shape: f32[2,8,32], index: 0, kind: input, shape index: {}]
  %s1 = inlined_call_operand.vmem [shape: f32[8,32], index: 1, kind: input, shape index: {}]
  %s2 = inlined_call_operand.vmem [shape: f32[2,1,32], index: 2, kind: input, shape index: {}]
  %s3 = inlined_call_operand.vmem [shape: f32[2,1,32], index: 3, kind: input, shape index: {}]
  %s4 = inlined_call_operand.vmem [shape: bf16[2,32,96], index: 4, kind: input, shape index: {}]
  %s5 = inlined_call_operand.vmem [shape: f32[2,1,96], index: 5, kind: input, shape index: {}]
  %s6 = inlined_call_operand.vmem [shape: bf16[2,32,32], index: 6, kind: input, shape index: {}]
  %s7 = inlined_call_operand.vmem [shape: f32[2,1,32], index: 7, kind: input, shape index: {}]
  %s8 = inlined_call_operand.vmem [shape: f32[2,1,32], index: 8, kind: input, shape index: {}]
  %s9 = inlined_call_operand.vmem [shape: f32[2,1,32], index: 9, kind: input, shape index: {}]
  %s10 = inlined_call_operand.vmem [shape: bf16[2,32,128], index: 10, kind: input, shape index: {}]
  %s11 = inlined_call_operand.vmem [shape: f32[2,1,128], index: 11, kind: input, shape index: {}]
  %s12 = inlined_call_operand.vmem [shape: bf16[2,128,32], index: 12, kind: input, shape index: {}]
  %s13 = inlined_call_operand.vmem [shape: f32[2,1,32], index: 13, kind: input, shape index: {}]
  %s14 = inlined_call_operand.hbm [shape: f32[2,8,32], index: 14, kind: output, shape index: {}]
  %s15 = sld [smem:[#allocation0]]
  $region93: #{tpu_custom_call.1} parent=0
    _
  %s17 = ssub.s32 1, %s15
  %s18 = scalar_select 0, %s17, %s15
  $region1: #{tpu_custom_call.1} parent=0
    #allocation3 [shape = 'u8[8192]{0}', space=vmem, size = 0x2000, scoped, tag = 'output window, operand 0']
    #allocation4 [shape = 's32[2]{0}', space=sflag, size = 0x8, scoped, tag = 'scoped memory for tpu_custom_call.1']
    %19 = vsyncpa [#allocation4], 0
    %s20 = scalar_lea.sflag [#allocation4], 1
    %21 = vsyncpa %s20, 0
    loop: start=0, step=1, limit=6
    $region2: #{tpu_custom_call.1} parent=1 // loop_pre_header
      _
    $region3: #{tpu_custom_call.1} parent=1 // loop_header
      %s23 = sphi 0, %s27
      %p24 = scmp.ge.s32.totalorder %s23, 6
      %s30 = sphi 0, %s42
      %s31 = sphi 0, %s38
      %s32 = sphi 0, %s30
      %s33 = sphi 0, %s31
      %s34 = sphi 0, %s32
      %s35 = sphi 0, %s33
      %s45 = sphi 0, %s47
      %s48 = sphi 0, %s45
      %s49 = sphi 0, %s48
      %s65 = sphi 0, %s49
      %s69 = sphi 0, %s69
      %s71 = sphi 0, %s69
      %s72 = sphi 0, %s71
      %s86 = sphi 0, %s72
      %s92 = sphi 0, %s94
      %s95 = sphi 0, %s92
      %s96 = sphi 0, %s95
      %s112 = sphi 0, %s96
      %s118 = sphi 0, %s120
      %s121 = sphi 0, %s118
      %s122 = sphi 0, %s121
      %s138 = sphi 0, %s122
      %s144 = sphi 0, %s146
      %s147 = sphi 0, %s144
      %s148 = sphi 0, %s147
      %s164 = sphi 0, %s148
      %s170 = sphi 0, %s172
      %s173 = sphi 0, %s170
      %s174 = sphi 0, %s173
      %s190 = sphi 0, %s174
      %s196 = sphi 0, %s198
      %s199 = sphi 0, %s196
      %s200 = sphi 0, %s199
      %s216 = sphi 0, %s200
      %s222 = sphi 0, %s224
      %s225 = sphi 0, %s222
      %s226 = sphi 0, %s225
      %s242 = sphi 0, %s226
      %s248 = sphi 0, %s250
      %s251 = sphi 0, %s248
      %s252 = sphi 0, %s251
      %s268 = sphi 0, %s252
      %s274 = sphi 0, %s276
      %s277 = sphi 0, %s274
      %s278 = sphi 0, %s277
      %s294 = sphi 0, %s278
      %s300 = sphi 0, %s302
      %s303 = sphi 0, %s300
      %s304 = sphi 0, %s303
      %s320 = sphi 0, %s304
      %s326 = sphi 0, %s328
      %s329 = sphi 0, %s326
      %s330 = sphi 0, %s329
      %s346 = sphi 0, %s330
      %s352 = sphi 0, %s354
      %s355 = sphi 0, %s352
      %s356 = sphi 0, %s355
      %s372 = sphi 0, %s356
      %s378 = sphi 0, %s380
      %s381 = sphi 0, %s378
      %s382 = sphi 0, %s381
      %s398 = sphi 0, %s382
      %s404 = sphi 0, %s406
      %s407 = sphi 0, %s404
      %s408 = sphi 0, %s407
      %s424 = sphi 0, %s408
    $region4: #{tpu_custom_call.1} parent=1 // loop_header_branch
      %26 = sbr.rel (%p24) target = $region8
    $region5: #{tpu_custom_call.1} parent=1 // loop_body
      %s28 = ssub.s32 %s23, 1
      %s29 = ssub.s32 %s23, 2
      %s36 = sadd.s32 1, %s31
      %p37 = scmp.ge.s32.totalorder %s36, 2
      %s38 = scalar_select %p37, 0, %s36
      %s39 = sadd.s32 1, %s30
      %s40 = scalar_select %p37, %s39, %s30
      %p41 = scmp.ge.s32.totalorder %s40, 2
      %s42 = scalar_select %p41, 0, %s40
      %s43 = ssub.s32 %s30, %s42
      %p44 = scmp.eq.s32.totalorder %s43, 0
      %s46 = sadd.s32 %s45, 1
      %s47 = scalar_select %p44, %s45, %s46
      %p50 = pneg %p44
      %p51 = scmp.eq.s32.totalorder %s23, 3
      %p52 = por %p50, %p51
      %p53 = scmp.ne.s32.totalorder %s45, %s48
      %p54 = scmp.eq.s32.totalorder %s23, 0
      %p55 = por %p53, %p54
      %p56 = scmp.ne.s32.totalorder %s45, %s48
      %p57 = scmp.eq.s32.totalorder %s28, 3
      %p58 = por %p56, %p57
      %p59 = scmp.ne.s32.totalorder %s48, %s49
      %p60 = scmp.eq.s32.totalorder %s28, 0
      %p61 = por %p59, %p60
      %p62 = scmp.ne.s32.totalorder %s48, %s49
      %p63 = scmp.eq.s32.totalorder %s29, 3
      %p64 = por %p62, %p63
      %p66 = scmp.ne.s32.totalorder %s49, %s65
      %p67 = scmp.eq.s32.totalorder %s29, 0
      %p68 = por %p66, %p67
      %s70 = sadd.s32 %s69, 1
      %p73 = scmp.eq.s32.totalorder %s23, 3
      %p74 = scmp.ne.s32.totalorder %s69, %s71
      %p75 = scmp.eq.s32.totalorder %s23, 0
      %p76 = por %p74, %p75
      %p77 = scmp.ne.s32.totalorder %s69, %s71
      %p78 = scmp.eq.s32.totalorder %s28, 3
      %p79 = por %p77, %p78
      %p80 = scmp.ne.s32.totalorder %s71, %s72
      %p81 = scmp.eq.s32.totalorder %s28, 0
      %p82 = por %p80, %p81
      %p83 = scmp.ne.s32.totalorder %s71, %s72
      %p84 = scmp.eq.s32.totalorder %s29, 3
      %p85 = por %p83, %p84
      %p87 = scmp.ne.s32.totalorder %s72, %s86
      %p88 = scmp.eq.s32.totalorder %s29, 0
      %p89 = por %p87, %p88
      %s90 = ssub.s32 %s31, %s38
      %p91 = scmp.eq.s32.totalorder %s90, 0
      %s93 = sadd.s32 %s92, 1
      %s94 = scalar_select %p91, %s92, %s93
      %p97 = pneg %p91
      %p98 = scmp.eq.s32.totalorder %s23, 3
      %p99 = por %p97, %p98
      %p100 = scmp.ne.s32.totalorder %s92, %s95
      %p101 = scmp.eq.s32.totalorder %s23, 0
      %p102 = por %p100, %p101
      %p103 = scmp.ne.s32.totalorder %s92, %s95
      %p104 = scmp.eq.s32.totalorder %s28, 3
      %p105 = por %p103, %p104
      %p106 = scmp.ne.s32.totalorder %s95, %s96
      %p107 = scmp.eq.s32.totalorder %s28, 0
      %p108 = por %p106, %p107
      %p109 = scmp.ne.s32.totalorder %s95, %s96
      %p110 = scmp.eq.s32.totalorder %s29, 3
      %p111 = por %p109, %p110
      %p113 = scmp.ne.s32.totalorder %s96, %s112
      %p114 = scmp.eq.s32.totalorder %s29, 0
      %p115 = por %p113, %p114
      %s116 = ssub.s32 %s31, %s38
      %p117 = scmp.eq.s32.totalorder %s116, 0
      %s119 = sadd.s32 %s118, 1
      %s120 = scalar_select %p117, %s118, %s119
      %p123 = pneg %p117
      %p124 = scmp.eq.s32.totalorder %s23, 3
      %p125 = por %p123, %p124
      %p126 = scmp.ne.s32.totalorder %s118, %s121
      %p127 = scmp.eq.s32.totalorder %s23, 0
      %p128 = por %p126, %p127
      %p129 = scmp.ne.s32.totalorder %s118, %s121
      %p130 = scmp.eq.s32.totalorder %s28, 3
      %p131 = por %p129, %p130
      %p132 = scmp.ne.s32.totalorder %s121, %s122
      %p133 = scmp.eq.s32.totalorder %s28, 0
      %p134 = por %p132, %p133
      %p135 = scmp.ne.s32.totalorder %s121, %s122
      %p136 = scmp.eq.s32.totalorder %s29, 3
      %p137 = por %p135, %p136
      %p139 = scmp.ne.s32.totalorder %s122, %s138
      %p140 = scmp.eq.s32.totalorder %s29, 0
      %p141 = por %p139, %p140
      %s142 = ssub.s32 %s31, %s38
      %p143 = scmp.eq.s32.totalorder %s142, 0
      %s145 = sadd.s32 %s144, 1
      %s146 = scalar_select %p143, %s144, %s145
      %p149 = pneg %p143
      %p150 = scmp.eq.s32.totalorder %s23, 3
      %p151 = por %p149, %p150
      %p152 = scmp.ne.s32.totalorder %s144, %s147
      %p153 = scmp.eq.s32.totalorder %s23, 0
      %p154 = por %p152, %p153
      %p155 = scmp.ne.s32.totalorder %s144, %s147
      %p156 = scmp.eq.s32.totalorder %s28, 3
      %p157 = por %p155, %p156
      %p158 = scmp.ne.s32.totalorder %s147, %s148
      %p159 = scmp.eq.s32.totalorder %s28, 0
      %p160 = por %p158, %p159
      %p161 = scmp.ne.s32.totalorder %s147, %s148
      %p162 = scmp.eq.s32.totalorder %s29, 3
      %p163 = por %p161, %p162
      %p165 = scmp.ne.s32.totalorder %s148, %s164
      %p166 = scmp.eq.s32.totalorder %s29, 0
      %p167 = por %p165, %p166
      %s168 = ssub.s32 %s31, %s38
      %p169 = scmp.eq.s32.totalorder %s168, 0
      %s171 = sadd.s32 %s170, 1
      %s172 = scalar_select %p169, %s170, %s171
      %p175 = pneg %p169
      %p176 = scmp.eq.s32.totalorder %s23, 3
      %p177 = por %p175, %p176
      %p178 = scmp.ne.s32.totalorder %s170, %s173
      %p179 = scmp.eq.s32.totalorder %s23, 0
      %p180 = por %p178, %p179
      %p181 = scmp.ne.s32.totalorder %s170, %s173
      %p182 = scmp.eq.s32.totalorder %s28, 3
      %p183 = por %p181, %p182
      %p184 = scmp.ne.s32.totalorder %s173, %s174
      %p185 = scmp.eq.s32.totalorder %s28, 0
      %p186 = por %p184, %p185
      %p187 = scmp.ne.s32.totalorder %s173, %s174
      %p188 = scmp.eq.s32.totalorder %s29, 3
      %p189 = por %p187, %p188
      %p191 = scmp.ne.s32.totalorder %s174, %s190
      %p192 = scmp.eq.s32.totalorder %s29, 0
      %p193 = por %p191, %p192
      %s194 = ssub.s32 %s31, %s38
      %p195 = scmp.eq.s32.totalorder %s194, 0
      %s197 = sadd.s32 %s196, 1
      %s198 = scalar_select %p195, %s196, %s197
      %p201 = pneg %p195
      %p202 = scmp.eq.s32.totalorder %s23, 3
      %p203 = por %p201, %p202
      %p204 = scmp.ne.s32.totalorder %s196, %s199
      %p205 = scmp.eq.s32.totalorder %s23, 0
      %p206 = por %p204, %p205
      %p207 = scmp.ne.s32.totalorder %s196, %s199
      %p208 = scmp.eq.s32.totalorder %s28, 3
      %p209 = por %p207, %p208
      %p210 = scmp.ne.s32.totalorder %s199, %s200
      %p211 = scmp.eq.s32.totalorder %s28, 0
      %p212 = por %p210, %p211
      %p213 = scmp.ne.s32.totalorder %s199, %s200
      %p214 = scmp.eq.s32.totalorder %s29, 3
      %p215 = por %p213, %p214
      %p217 = scmp.ne.s32.totalorder %s200, %s216
      %p218 = scmp.eq.s32.totalorder %s29, 0
      %p219 = por %p217, %p218
      %s220 = ssub.s32 %s31, %s38
      %p221 = scmp.eq.s32.totalorder %s220, 0
      %s223 = sadd.s32 %s222, 1
      %s224 = scalar_select %p221, %s222, %s223
      %p227 = pneg %p221
      %p228 = scmp.eq.s32.totalorder %s23, 3
      %p229 = por %p227, %p228
      %p230 = scmp.ne.s32.totalorder %s222, %s225
      %p231 = scmp.eq.s32.totalorder %s23, 0
      %p232 = por %p230, %p231
      %p233 = scmp.ne.s32.totalorder %s222, %s225
      %p234 = scmp.eq.s32.totalorder %s28, 3
      %p235 = por %p233, %p234
      %p236 = scmp.ne.s32.totalorder %s225, %s226
      %p237 = scmp.eq.s32.totalorder %s28, 0
      %p238 = por %p236, %p237
      %p239 = scmp.ne.s32.totalorder %s225, %s226
      %p240 = scmp.eq.s32.totalorder %s29, 3
      %p241 = por %p239, %p240
      %p243 = scmp.ne.s32.totalorder %s226, %s242
      %p244 = scmp.eq.s32.totalorder %s29, 0
      %p245 = por %p243, %p244
      %s246 = ssub.s32 %s31, %s38
      %p247 = scmp.eq.s32.totalorder %s246, 0
      %s249 = sadd.s32 %s248, 1
      %s250 = scalar_select %p247, %s248, %s249
      %p253 = pneg %p247
      %p254 = scmp.eq.s32.totalorder %s23, 3
      %p255 = por %p253, %p254
      %p256 = scmp.ne.s32.totalorder %s248, %s251
      %p257 = scmp.eq.s32.totalorder %s23, 0
      %p258 = por %p256, %p257
      %p259 = scmp.ne.s32.totalorder %s248, %s251
      %p260 = scmp.eq.s32.totalorder %s28, 3
      %p261 = por %p259, %p260
      %p262 = scmp.ne.s32.totalorder %s251, %s252
      %p263 = scmp.eq.s32.totalorder %s28, 0
      %p264 = por %p262, %p263
      %p265 = scmp.ne.s32.totalorder %s251, %s252
      %p266 = scmp.eq.s32.totalorder %s29, 3
      %p267 = por %p265, %p266
      %p269 = scmp.ne.s32.totalorder %s252, %s268
      %p270 = scmp.eq.s32.totalorder %s29, 0
      %p271 = por %p269, %p270
      %s272 = ssub.s32 %s31, %s38
      %p273 = scmp.eq.s32.totalorder %s272, 0
      %s275 = sadd.s32 %s274, 1
      %s276 = scalar_select %p273, %s274, %s275
      %p279 = pneg %p273
      %p280 = scmp.eq.s32.totalorder %s23, 3
      %p281 = por %p279, %p280
      %p282 = scmp.ne.s32.totalorder %s274, %s277
      %p283 = scmp.eq.s32.totalorder %s23, 0
      %p284 = por %p282, %p283
      %p285 = scmp.ne.s32.totalorder %s274, %s277
      %p286 = scmp.eq.s32.totalorder %s28, 3
      %p287 = por %p285, %p286
      %p288 = scmp.ne.s32.totalorder %s277, %s278
      %p289 = scmp.eq.s32.totalorder %s28, 0
      %p290 = por %p288, %p289
      %p291 = scmp.ne.s32.totalorder %s277, %s278
      %p292 = scmp.eq.s32.totalorder %s29, 3
      %p293 = por %p291, %p292
      %p295 = scmp.ne.s32.totalorder %s278, %s294
      %p296 = scmp.eq.s32.totalorder %s29, 0
      %p297 = por %p295, %p296
      %s298 = ssub.s32 %s31, %s38
      %p299 = scmp.eq.s32.totalorder %s298, 0
      %s301 = sadd.s32 %s300, 1
      %s302 = scalar_select %p299, %s300, %s301
      %p305 = pneg %p299
      %p306 = scmp.eq.s32.totalorder %s23, 3
      %p307 = por %p305, %p306
      %p308 = scmp.ne.s32.totalorder %s300, %s303
      %p309 = scmp.eq.s32.totalorder %s23, 0
      %p310 = por %p308, %p309
      %p311 = scmp.ne.s32.totalorder %s300, %s303
      %p312 = scmp.eq.s32.totalorder %s28, 3
      %p313 = por %p311, %p312
      %p314 = scmp.ne.s32.totalorder %s303, %s304
      %p315 = scmp.eq.s32.totalorder %s28, 0
      %p316 = por %p314, %p315
      %p317 = scmp.ne.s32.totalorder %s303, %s304
      %p318 = scmp.eq.s32.totalorder %s29, 3
      %p319 = por %p317, %p318
      %p321 = scmp.ne.s32.totalorder %s304, %s320
      %p322 = scmp.eq.s32.totalorder %s29, 0
      %p323 = por %p321, %p322
      %s324 = ssub.s32 %s31, %s38
      %p325 = scmp.eq.s32.totalorder %s324, 0
      %s327 = sadd.s32 %s326, 1
      %s328 = scalar_select %p325, %s326, %s327
      %p331 = pneg %p325
      %p332 = scmp.eq.s32.totalorder %s23, 3
      %p333 = por %p331, %p332
      %p334 = scmp.ne.s32.totalorder %s326, %s329
      %p335 = scmp.eq.s32.totalorder %s23, 0
      %p336 = por %p334, %p335
      %p337 = scmp.ne.s32.totalorder %s326, %s329
      %p338 = scmp.eq.s32.totalorder %s28, 3
      %p339 = por %p337, %p338
      %p340 = scmp.ne.s32.totalorder %s329, %s330
      %p341 = scmp.eq.s32.totalorder %s28, 0
      %p342 = por %p340, %p341
      %p343 = scmp.ne.s32.totalorder %s329, %s330
      %p344 = scmp.eq.s32.totalorder %s29, 3
      %p345 = por %p343, %p344
      %p347 = scmp.ne.s32.totalorder %s330, %s346
      %p348 = scmp.eq.s32.totalorder %s29, 0
      %p349 = por %p347, %p348
      %s350 = ssub.s32 %s31, %s38
      %p351 = scmp.eq.s32.totalorder %s350, 0
      %s353 = sadd.s32 %s352, 1
      %s354 = scalar_select %p351, %s352, %s353
      %p357 = pneg %p351
      %p358 = scmp.eq.s32.totalorder %s23, 3
      %p359 = por %p357, %p358
      %p360 = scmp.ne.s32.totalorder %s352, %s355
      %p361 = scmp.eq.s32.totalorder %s23, 0
      %p362 = por %p360, %p361
      %p363 = scmp.ne.s32.totalorder %s352, %s355
      %p364 = scmp.eq.s32.totalorder %s28, 3
      %p365 = por %p363, %p364
      %p366 = scmp.ne.s32.totalorder %s355, %s356
      %p367 = scmp.eq.s32.totalorder %s28, 0
      %p368 = por %p366, %p367
      %p369 = scmp.ne.s32.totalorder %s355, %s356
      %p370 = scmp.eq.s32.totalorder %s29, 3
      %p371 = por %p369, %p370
      %p373 = scmp.ne.s32.totalorder %s356, %s372
      %p374 = scmp.eq.s32.totalorder %s29, 0
      %p375 = por %p373, %p374
      %s376 = ssub.s32 %s31, %s38
      %p377 = scmp.eq.s32.totalorder %s376, 0
      %s379 = sadd.s32 %s378, 1
      %s380 = scalar_select %p377, %s378, %s379
      %p383 = pneg %p377
      %p384 = scmp.eq.s32.totalorder %s23, 3
      %p385 = por %p383, %p384
      %p386 = scmp.ne.s32.totalorder %s378, %s381
      %p387 = scmp.eq.s32.totalorder %s23, 0
      %p388 = por %p386, %p387
      %p389 = scmp.ne.s32.totalorder %s378, %s381
      %p390 = scmp.eq.s32.totalorder %s28, 3
      %p391 = por %p389, %p390
      %p392 = scmp.ne.s32.totalorder %s381, %s382
      %p393 = scmp.eq.s32.totalorder %s28, 0
      %p394 = por %p392, %p393
      %p395 = scmp.ne.s32.totalorder %s381, %s382
      %p396 = scmp.eq.s32.totalorder %s29, 3
      %p397 = por %p395, %p396
      %p399 = scmp.ne.s32.totalorder %s382, %s398
      %p400 = scmp.eq.s32.totalorder %s29, 0
      %p401 = por %p399, %p400
      %s402 = ssub.s32 %s30, %s42
      %p403 = scmp.eq.s32.totalorder %s402, 0
      %s405 = sadd.s32 %s404, 1
      %s406 = scalar_select %p403, %s404, %s405
      %p409 = pneg %p403
      %p410 = scmp.eq.s32.totalorder %s23, 3
      %p411 = por %p409, %p410
      %p412 = scmp.ne.s32.totalorder %s404, %s407
      %p413 = scmp.eq.s32.totalorder %s23, 0
      %p414 = por %p412, %p413
      %p415 = scmp.ne.s32.totalorder %s404, %s407
      %p416 = scmp.eq.s32.totalorder %s28, 3
      %p417 = por %p415, %p416
      %p418 = scmp.ne.s32.totalorder %s407, %s408
      %p419 = scmp.eq.s32.totalorder %s28, 0
      %p420 = por %p418, %p419
      %p421 = scmp.ne.s32.totalorder %s407, %s408
      %p422 = scmp.eq.s32.totalorder %s29, 3
      %p423 = por %p421, %p422
      %p425 = scmp.ne.s32.totalorder %s408, %s424
      %p426 = scmp.eq.s32.totalorder %s29, 0
      %p427 = por %p425, %p426
      %p428 = scmp.le.s32.totalorder 1, %s23
      %p429 = scmp.lt.s32.totalorder %s23, 5
      %p430 = pnand %p428, %p429
      %p431 = pneg %p430
      // Predicated region
      $region9: #{tpu_custom_call.1} parent=5 // pred_check
        _
      $region10: #{tpu_custom_call.1} parent=5 // pred_check_branch
        %433 = sbr.rel (%p430) target = $region12
      $region11: #{tpu_custom_call.1} parent=5 // pred_region
        %s434 = ssub.s32 %s23, 1
        // Predicated region
        $region13: #{tpu_custom_call.1} parent=11 // pred_check
          %p435 = pneg %p82
        $region14: #{tpu_custom_call.1} parent=11 // pred_check_branch
          %437 = sbr.rel (%p435) target = $region16
        $region15: #{tpu_custom_call.1} parent=11 // pred_region
          _
        $region16: #{tpu_custom_call.1} parent=11 // pred_fallthru
          _
      $region12: #{tpu_custom_call.1} parent=5 // pred_fallthru
        _
      %p438 = scmp.lt.s32.totalorder %s23, 4
      // Predicated region
      $region17: #{tpu_custom_call.1} parent=5 // pred_check
        %p439 = pneg %p438
      $region18: #{tpu_custom_call.1} parent=5 // pred_check_branch
        %441 = sbr.rel (%p439) target = $region20
      $region19: #{tpu_custom_call.1} parent=5 // pred_region
        // Predicated region
        $region21: #{tpu_custom_call.1} parent=19 // pred_check
          %p442 = pneg %p55
        $region22: #{tpu_custom_call.1} parent=19 // pred_check_branch
          %444 = sbr.rel (%p442) target = $region24
        $region23: #{tpu_custom_call.1} parent=19 // pred_region
          %p445 = scmp.lt.s32.totalorder %s30, 1
          %s446 = scalar_select %p445, %s30, 1
          %s447 = smul.addr %s446, 8
          %s448 = scalar_lea.vmem %s0, %s447
        $region24: #{tpu_custom_call.1} parent=19 // pred_fallthru
          _
        // Predicated region
        $region25: #{tpu_custom_call.1} parent=19 // pred_check
          %p449 = pneg %p102
        $region26: #{tpu_custom_call.1} parent=19 // pred_check_branch
          %451 = sbr.rel (%p449) target = $region28
        $region27: #{tpu_custom_call.1} parent=19 // pred_region
          %p452 = scmp.lt.s32.totalorder %s31, 1
          %s453 = scalar_select %p452, %s31, 1
          %s454 = scalar_lea.vmem %s2, %s453
        $region28: #{tpu_custom_call.1} parent=19 // pred_fallthru
          _
        // Predicated region
        $region29: #{tpu_custom_call.1} parent=19 // pred_check
          %p455 = pneg %p128
        $region30: #{tpu_custom_call.1} parent=19 // pred_check_branch
          %457 = sbr.rel (%p455) target = $region32
        $region31: #{tpu_custom_call.1} parent=19 // pred_region
          %p458 = scmp.lt.s32.totalorder %s31, 1
          %s459 = scalar_select %p458, %s31, 1
          %s460 = scalar_lea.vmem %s3, %s459
        $region32: #{tpu_custom_call.1} parent=19 // pred_fallthru
          _
        // Predicated region
        $region33: #{tpu_custom_call.1} parent=19 // pred_check
          %p461 = pneg %p154
        $region34: #{tpu_custom_call.1} parent=19 // pred_check_branch
          %463 = sbr.rel (%p461) target = $region36
        $region35: #{tpu_custom_call.1} parent=19 // pred_region
          %p464 = scmp.lt.s32.totalorder %s31, 1
          %s465 = scalar_select %p464, %s31, 1
          %s466 = smul.addr %s465, 4
          %s467 = smul.addr %s466, 4
          %s468 = scalar_lea.vmem %s4, %s467
        $region36: #{tpu_custom_call.1} parent=19 // pred_fallthru
          _
        // Predicated region
        $region37: #{tpu_custom_call.1} parent=19 // pred_check
          %p469 = pneg %p180
        $region38: #{tpu_custom_call.1} parent=19 // pred_check_branch
          %471 = sbr.rel (%p469) target = $region40
        $region39: #{tpu_custom_call.1} parent=19 // pred_region
          %p472 = scmp.lt.s32.totalorder %s31, 1
          %s473 = scalar_select %p472, %s31, 1
          %s474 = scalar_lea.vmem %s5, %s473
        $region40: #{tpu_custom_call.1} parent=19 // pred_fallthru
          _
        // Predicated region
        $region41: #{tpu_custom_call.1} parent=19 // pred_check
          %p475 = pneg %p206
        $region42: #{tpu_custom_call.1} parent=19 // pred_check_branch
          %477 = sbr.rel (%p475) target = $region44
        $region43: #{tpu_custom_call.1} parent=19 // pred_region
          %p478 = scmp.lt.s32.totalorder %s31, 1
          %s479 = scalar_select %p478, %s31, 1
          %s480 = smul.addr %s479, 4
          %s481 = smul.addr %s480, 4
          %s482 = scalar_lea.vmem %s6, %s481
        $region44: #{tpu_custom_call.1} parent=19 // pred_fallthru
          _
        // Predicated region
        $region45: #{tpu_custom_call.1} parent=19 // pred_check
          %p483 = pneg %p232
        $region46: #{tpu_custom_call.1} parent=19 // pred_check_branch
          %485 = sbr.rel (%p483) target = $region48
        $region47: #{tpu_custom_call.1} parent=19 // pred_region
          %p486 = scmp.lt.s32.totalorder %s31, 1
          %s487 = scalar_select %p486, %s31, 1
          %s488 = scalar_lea.vmem %s7, %s487
        $region48: #{tpu_custom_call.1} parent=19 // pred_fallthru
          _
        // Predicated region
        $region49: #{tpu_custom_call.1} parent=19 // pred_check
          %p489 = pneg %p258
        $region50: #{tpu_custom_call.1} parent=19 // pred_check_branch
          %491 = sbr.rel (%p489) target = $region52
        $region51: #{tpu_custom_call.1} parent=19 // pred_region
          %p492 = scmp.lt.s32.totalorder %s31, 1
          %s493 = scalar_select %p492, %s31, 1
          %s494 = scalar_lea.vmem %s8, %s493
        $region52: #{tpu_custom_call.1} parent=19 // pred_fallthru
          _
        // Predicated region
        $region53: #{tpu_custom_call.1} parent=19 // pred_check
          %p495 = pneg %p284
        $region54: #{tpu_custom_call.1} parent=19 // pred_check_branch
          %497 = sbr.rel (%p495) target = $region56
        $region55: #{tpu_custom_call.1} parent=19 // pred_region
          %p498 = scmp.lt.s32.totalorder %s31, 1
          %s499 = scalar_select %p498, %s31, 1
          %s500 = scalar_lea.vmem %s9, %s499
        $region56: #{tpu_custom_call.1} parent=19 // pred_fallthru
          _
        // Predicated region
        $region57: #{tpu_custom_call.1} parent=19 // pred_check
          %p501 = pneg %p310
        $region58: #{tpu_custom_call.1} parent=19 // pred_check_branch
          %503 = sbr.rel (%p501) target = $region60
        $region59: #{tpu_custom_call.1} parent=19 // pred_region
          %p504 = scmp.lt.s32.totalorder %s31, 1
          %s505 = scalar_select %p504, %s31, 1
          %s506 = smul.addr %s505, 4
          %s507 = smul.addr %s506, 4
          %s508 = scalar_lea.vmem %s10, %s507
        $region60: #{tpu_custom_call.1} parent=19 // pred_fallthru
          _
        // Predicated region
        $region61: #{tpu_custom_call.1} parent=19 // pred_check
          %p509 = pneg %p336
        $region62: #{tpu_custom_call.1} parent=19 // pred_check_branch
          %511 = sbr.rel (%p509) target = $region64
        $region63: #{tpu_custom_call.1} parent=19 // pred_region
          %p512 = scmp.lt.s32.totalorder %s31, 1
          %s513 = scalar_select %p512, %s31, 1
          %s514 = scalar_lea.vmem %s11, %s513
        $region64: #{tpu_custom_call.1} parent=19 // pred_fallthru
          _
        // Predicated region
        $region65: #{tpu_custom_call.1} parent=19 // pred_check
          %p515 = pneg %p362
        $region66: #{tpu_custom_call.1} parent=19 // pred_check_branch
          %517 = sbr.rel (%p515) target = $region68
        $region67: #{tpu_custom_call.1} parent=19 // pred_region
          %p518 = scmp.lt.s32.totalorder %s31, 1
          %s519 = scalar_select %p518, %s31, 1
          %s520 = smul.addr %s519, 16
          %s521 = smul.addr %s520, 4
          %s522 = scalar_lea.vmem %s12, %s521
        $region68: #{tpu_custom_call.1} parent=19 // pred_fallthru
          _
        // Predicated region
        $region69: #{tpu_custom_call.1} parent=19 // pred_check
          %p523 = pneg %p388
        $region70: #{tpu_custom_call.1} parent=19 // pred_check_branch
          %525 = sbr.rel (%p523) target = $region72
        $region71: #{tpu_custom_call.1} parent=19 // pred_region
          %p526 = scmp.lt.s32.totalorder %s31, 1
          %s527 = scalar_select %p526, %s31, 1
          %s528 = scalar_lea.vmem %s13, %s527
        $region72: #{tpu_custom_call.1} parent=19 // pred_fallthru
          _
      $region20: #{tpu_custom_call.1} parent=5 // pred_fallthru
        _
      %p529 = scmp.le.s32.totalorder 1, %s23
      %p530 = scmp.lt.s32.totalorder %s23, 5
      %p531 = pnand %p529, %p530
      %p532 = pneg %p531
      // Predicated region
      $region73: #{tpu_custom_call.1} parent=5 // pred_check
        _
      $region74: #{tpu_custom_call.1} parent=5 // pred_check_branch
        %534 = sbr.rel (%p531) target = $region76
      $region75: #{tpu_custom_call.1} parent=5 // pred_region
        %s535 = ssub.s32 %s23, 1
        %p536 = scmp.lt.s32.totalorder %s32, 1
        %s537 = scalar_select %p536, %s32, 1
        %s538 = smul.addr %s537, 8
        %s539 = scalar_lea.vmem %s0, %s538
        %p540 = pneg %p61
        %p541 = pneg %p58
        %p542 = pneg %p82
        %p543 = pneg %p79
        %p544 = scmp.lt.s32.totalorder %s33, 1
        %s545 = scalar_select %p544, %s33, 1
        %s546 = scalar_lea.vmem %s2, %s545
        %p547 = pneg %p108
        %p548 = pneg %p105
        %p549 = scmp.lt.s32.totalorder %s33, 1
        %s550 = scalar_select %p549, %s33, 1
        %s551 = scalar_lea.vmem %s3, %s550
        %p552 = pneg %p134
        %p553 = pneg %p131
        %p554 = scmp.lt.s32.totalorder %s33, 1
        %s555 = scalar_select %p554, %s33, 1
        %s556 = smul.addr %s555, 4
        %s557 = smul.addr %s556, 4
        %s558 = scalar_lea.vmem %s4, %s557
        %p559 = pneg %p160
        %p560 = pneg %p157
        %p561 = scmp.lt.s32.totalorder %s33, 1
        %s562 = scalar_select %p561, %s33, 1
        %s563 = scalar_lea.vmem %s5, %s562
        %p564 = pneg %p186
        %p565 = pneg %p183
        %p566 = scmp.lt.s32.totalorder %s33, 1
        %s567 = scalar_select %p566, %s33, 1
        %s568 = smul.addr %s567, 4
        %s569 = smul.addr %s568, 4
        %s570 = scalar_lea.vmem %s6, %s569
        %p571 = pneg %p212
        %p572 = pneg %p209
        %p573 = scmp.lt.s32.totalorder %s33, 1
        %s574 = scalar_select %p573, %s33, 1
        %s575 = scalar_lea.vmem %s7, %s574
        %p576 = pneg %p238
        %p577 = pneg %p235
        %p578 = scmp.lt.s32.totalorder %s33, 1
        %s579 = scalar_select %p578, %s33, 1
        %s580 = scalar_lea.vmem %s8, %s579
        %p581 = pneg %p264
        %p582 = pneg %p261
        %p583 = scmp.lt.s32.totalorder %s33, 1
        %s584 = scalar_select %p583, %s33, 1
        %s585 = scalar_lea.vmem %s9, %s584
        %p586 = pneg %p290
        %p587 = pneg %p287
        %p588 = scmp.lt.s32.totalorder %s33, 1
        %s589 = scalar_select %p588, %s33, 1
        %s590 = smul.addr %s589, 4
        %s591 = smul.addr %s590, 4
        %s592 = scalar_lea.vmem %s10, %s591
        %p593 = pneg %p316
        %p594 = pneg %p313
        %p595 = scmp.lt.s32.totalorder %s33, 1
        %s596 = scalar_select %p595, %s33, 1
        %s597 = scalar_lea.vmem %s11, %s596
        %p598 = pneg %p342
        %p599 = pneg %p339
        %p600 = scmp.lt.s32.totalorder %s33, 1
        %s601 = scalar_select %p600, %s33, 1
        %s602 = smul.addr %s601, 16
        %s603 = smul.addr %s602, 4
        %s604 = scalar_lea.vmem %s12, %s603
        %p605 = pneg %p368
        %p606 = pneg %p365
        %p607 = scmp.lt.s32.totalorder %s33, 1
        %s608 = scalar_select %p607, %s33, 1
        %s609 = scalar_lea.vmem %s13, %s608
        %p610 = pneg %p394
        %p611 = pneg %p391
        %p612 = pneg %p420
        %p613 = pneg %p417
        %s614 = sand.u32 %s407, 1
        %s615 = scalar_lea.sflag [#allocation4], %s614
        %s616 = sand.u32 %s407, 1
        %s617 = smul.addr %s616, 8
        %s618 = scalar_lea.vmem [#allocation3], %s617
        %p619 = scmp.lt.s32.totalorder %s32, 1
        %s620 = scalar_select %p619, %s32, 1
        %s621 = smul.addr %s620, 8
        %s622 = scalar_lea.vmem %s0, %s621
        %p623 = scmp.lt.s32.totalorder %s33, 1
        %s624 = scalar_select %p623, %s33, 1
        %s625 = scalar_lea.vmem %s2, %s624
        %p626 = scmp.lt.s32.totalorder %s33, 1
        %s627 = scalar_select %p626, %s33, 1
        %s628 = scalar_lea.vmem %s3, %s627
        %p629 = scmp.lt.s32.totalorder %s33, 1
        %s630 = scalar_select %p629, %s33, 1
        %s631 = smul.addr %s630, 4
        %s632 = smul.addr %s631, 4
        %s633 = scalar_lea.vmem %s4, %s632
        %p634 = scmp.lt.s32.totalorder %s33, 1
        %s635 = scalar_select %p634, %s33, 1
        %s636 = scalar_lea.vmem %s5, %s635
        %p637 = scmp.lt.s32.totalorder %s33, 1
        %s638 = scalar_select %p637, %s33, 1
        %s639 = smul.addr %s638, 4
        %s640 = smul.addr %s639, 4
        %s641 = scalar_lea.vmem %s6, %s640
        %p642 = scmp.lt.s32.totalorder %s33, 1
        %s643 = scalar_select %p642, %s33, 1
        %s644 = scalar_lea.vmem %s7, %s643
        %p645 = scmp.lt.s32.totalorder %s33, 1
        %s646 = scalar_select %p645, %s33, 1
        %s647 = scalar_lea.vmem %s8, %s646
        %p648 = scmp.lt.s32.totalorder %s33, 1
        %s649 = scalar_select %p648, %s33, 1
        %s650 = scalar_lea.vmem %s9, %s649
        %p651 = scmp.lt.s32.totalorder %s33, 1
        %s652 = scalar_select %p651, %s33, 1
        %s653 = smul.addr %s652, 4
        %s654 = smul.addr %s653, 4
        %s655 = scalar_lea.vmem %s10, %s654
        %p656 = scmp.lt.s32.totalorder %s33, 1
        %s657 = scalar_select %p656, %s33, 1
        %s658 = scalar_lea.vmem %s11, %s657
        %p659 = scmp.lt.s32.totalorder %s33, 1
        %s660 = scalar_select %p659, %s33, 1
        %s661 = smul.addr %s660, 16
        %s662 = smul.addr %s661, 4
        %s663 = scalar_lea.vmem %s12, %s662
        %p664 = scmp.lt.s32.totalorder %s33, 1
        %s665 = scalar_select %p664, %s33, 1
        %s666 = scalar_lea.vmem %s13, %s665
        %p668 = scmp.eq.s32.totalorder %s33, 0
        // Predicated region
        $region77: #{tpu_custom_call.1} parent=75 // pred_check
          %p669 = pneg %p668
        $region78: #{tpu_custom_call.1} parent=75 // pred_check_branch
          %671 = sbr.rel (%p669) target = $region80
        $region79: #{tpu_custom_call.1} parent=75 // pred_region
          %v672 = vld [vmem:[%s622] sm:$0xff]
          %v673 = vld [vmem:[%s1] sm:$0xff]
          %v674 = vadd.f32 %v672, %v673
          %vm675 = vcmask 261120
          %676 = vst.msk [vmem:[%s618] sm:$0xff] %vm675, %v674
        $region80: #{tpu_custom_call.1} parent=75 // pred_fallthru
          _
        %v677 = vld [vmem:[%s618] sm:$0xff]
        %v678 = vld [vmem:[%s625] sm:$0x1]
        %v679 = vld [vmem:[%s628] sm:$0x1]
        %vm680 = vcmask 261120
        %v681 = vsel %vm680, %v677, 0.0
        %682 = vadd.xlane.f32.xlu0 %v681
        %v683 = vpop.xlane.xlu0 %682
        %v684 = vrcp.pop 32.0
        %v685 = vmul.f32 32.0, %v684
        %v686 = vsub.f32 1.0, %v685
        %v687 = vmul.f32 %v684, %v686
        %v688 = vadd.f32 %v684, %v687
        %vm689 = vweird.f32 %v684
        %v690 = vsel %vm689, %v684, %v688
        %v691 = vmul.f32 %v683, %v690
        %v692 = vsub.f32 %v677, %v691
        %v693 = vmul.f32 %v692, %v692
        %v694 = vsel %vm680, %v693, 0.0
        %695 = vadd.xlane.f32.xlu0 %v694
        %v696 = vpop.xlane.xlu0 %695
        %v697 = vmul.f32 %v696, %v690
        %v698 = vadd.f32 %v697, 1e-05
        %v699 = vrsqrt.pop %v698
        %v700 = vmul.f32 %v699, %v698
        %v701 = vmul.f32 %v700, %v699
        %v702 = vmul.f32 0.5, %v701
        %v703 = vsub.f32 1.5, %v702
        %v704 = vmul.f32 %v699, %v703
        %vm705 = vweird.f32 %v698
        %vm706 = vweird.f32 %v699
        %vm707 = vmor %vm705, %vm706
        %v708 = vsel %vm707, %v699, %v704
        %v709 = vmul.f32 %v692, %v708
        %v711 = vperm.slane %v678, 0
        %v713 = vmul.f32 %v709, %v711
        %v715 = vperm.slane %v679, 0
        %v717 = vadd.f32 %v713, %v715
        %v718 = vpack.c.bf16 %v717, %v717
        %v719 = vld [vmem:[%s633] sm:$0xf]
        %v720 = vld [vmem:[%s633 + $0x4] sm:$0xf]
        %v721 = vld [vmem:[%s633 + $0x8] sm:$0xf]
        %v722 = vld [vmem:[%s633 + $0xc] sm:$0xf]
        %v723 = vld [vmem:[%s636] sm:$0x1]
        %v725 = vperm.slane %v723, 0
        %v731 = vunpack.c.l.b16 %v719
        %v732 = vunpack.c.l.b16 %v720
        %v733 = vunpack.c.l.b16 %v721
        %v734 = vunpack.c.l.b16 %v722
        %v735 = vpack.c.b16 %v732, %v731
        %v736 = vpack.c.b16 %v734, %v733
        %v740 = vsel %vm680, %v718, 0
        %742 = vmatpush.bf16.msra.mxu0 0
        %743 = vmatpush.bf16.msra.mxu0 0
        %744 = vmatpush.bf16.msra.mxu0 0
        %745 = vmatpush.bf16.msra.mxu0 0
        %746 = vmatpush.bf16.msra.mxu0 0
        %747 = vmatpush.bf16.msra.mxu0 0
        %748 = vmatpush.bf16.msra.mxu0 %v736
        %749 = vmatpush.bf16.msra.mxu0 %v735
        %750 = vmatmul.bf16.gmra.mxu0 %v740
        %v751 = vpop.f32.mrf.mxu0
        %v752 = vadd.f32 %v725, %v751
        %v753 = vpop.f32.mrf.mxu0
        %754 = vdwg.mxu0
        %v755 = vlaneseq
        %v756 = vshrl.u32 %v755, 7
        %v757 = vlaneseq
        %v758 = vand.u32 %v757, 127
        %vm759 = vcmp.le.s32.totalorder %v758, %v756
        %v760 = vpack.c.bf16 %v752, %v752
        %v762 = vunpack.c.l.b16 %v760
        %v763 = vpack.c.b16 %v762, %v762
        %764 = vrot.lane.b32.xlu0 %v763, 96
        %v765 = vpop.permute.xlu0 %764
        %vm766 = vcmask 64512
        %v768 = vsel %vm766, %v760, 0
        %v771 = vsel %vm766, %v765, 0
        %773 = vmatpush.bf16.xpose.msra.mxu0 0
        %774 = vmatpush.bf16.xpose.msra.mxu0 0
        %775 = vmatpush.bf16.xpose.msra.mxu0 0
        %776 = vmatpush.bf16.xpose.msra.mxu0 0
        %777 = vmatpush.bf16.xpose.msra.mxu0 0
        %778 = vmatpush.bf16.xpose.msra.mxu0 0
        %779 = vmatpush.bf16.xpose.msra.mxu0 0
        %780 = vmatpush.bf16.xpose.msra.mxu0 %v771
        %781 = vmatmul.bf16.gmra.mxu0 %v768
        %v782 = vpop.f32.mrf.mxu0
        %v783 = vadd.f32 0.0, %v782
        %v784 = vpop.f32.mrf.mxu0
        %785 = vdwg.mxu0
        %v786 = vmul.f32 %v783, 0.35355338
        %v787 = vsel %vm759, %v786, -1e+30
        %v788 = vsel %vm766, %v787, -inf
        %789 = vmax.xlane.f32.xlu0 %v788
        %v790 = vpop.xlane.xlu0 %789
        %v791 = vsub.f32 %v787, %v790
        %v792 = vmul.f32 %v791, 1.442695
        %v793 = vpow.pop %v792
        %v794 = vsel %vm766, %v793, 0.0
        %795 = vadd.xlane.f32.xlu0 %v794
        %v796 = vpop.xlane.xlu0 %795
        %v797 = vrcp.pop %v796
        %v798 = vmul.f32 %v793, %v797
        %v799 = vpack.c.bf16 %v798, %v798
        %800 = vrot.lane.b32.xlu0 %v763, 64
        %v801 = vpop.permute.xlu0 %800
        %v803 = vsel %vm766, %v799, 0
        %vm805 = vcmask 1043456
        %v807 = vsel %vm805, %v801, 0
        %809 = vmatpush.bf16.msra.mxu0 0
        %810 = vmatpush.bf16.msra.mxu0 0
        %811 = vmatpush.bf16.msra.mxu0 0
        %812 = vmatpush.bf16.msra.mxu0 0
        %813 = vmatpush.bf16.msra.mxu0 0
        %814 = vmatpush.bf16.msra.mxu0 0
        %815 = vmatpush.bf16.msra.mxu0 0
        %816 = vmatpush.bf16.msra.mxu0 %v807
        %817 = vmatmul.bf16.gmra.mxu0 %v803
        %v818 = vpop.f32.mrf.mxu0
        %v819 = vadd.f32 0.0, %v818
        %v820 = vpop.f32.mrf.mxu0
        %821 = vdwg.mxu0
        %822 = vst.msk [vmem:[#allocation2] sm:$0xff] %vm766, %v819
        %823 = vrot.lane.b32.xlu0 %v763, 120
        %v824 = vpop.permute.xlu0 %823
        %825 = vrot.lane.b32.xlu0 %v763, 88
        %v826 = vpop.permute.xlu0 %825
        %v828 = vsel %vm766, %v824, 0
        %v831 = vsel %vm766, %v826, 0
        %833 = vmatpush.bf16.xpose.msra.mxu0 0
        %834 = vmatpush.bf16.xpose.msra.mxu0 0
        %835 = vmatpush.bf16.xpose.msra.mxu0 0
        %836 = vmatpush.bf16.xpose.msra.mxu0 0
        %837 = vmatpush.bf16.xpose.msra.mxu0 0
        %838 = vmatpush.bf16.xpose.msra.mxu0 0
        %839 = vmatpush.bf16.xpose.msra.mxu0 0
        %840 = vmatpush.bf16.xpose.msra.mxu0 %v831
        %841 = vmatmul.bf16.gmra.mxu0 %v828
        %v842 = vpop.f32.mrf.mxu0
        %v843 = vadd.f32 0.0, %v842
        %v844 = vpop.f32.mrf.mxu0
        %845 = vdwg.mxu0
        %v846 = vmul.f32 %v843, 0.35355338
        %v847 = vsel %vm759, %v846, -1e+30
        %v848 = vsel %vm766, %v847, -inf
        %849 = vmax.xlane.f32.xlu0 %v848
        %v850 = vpop.xlane.xlu0 %849
        %v851 = vsub.f32 %v847, %v850
        %v852 = vmul.f32 %v851, 1.442695
        %v853 = vpow.pop %v852
        %v854 = vsel %vm766, %v853, 0.0
        %855 = vadd.xlane.f32.xlu0 %v854
        %v856 = vpop.xlane.xlu0 %855
        %v857 = vrcp.pop %v856
        %v858 = vmul.f32 %v853, %v857
        %v859 = vpack.c.bf16 %v858, %v858
        %860 = vrot.lane.b32.xlu0 %v763, 56
        %v861 = vpop.permute.xlu0 %860
        %v863 = vsel %vm766, %v859, 0
        %v866 = vsel %vm805, %v861, 0
        %868 = vmatpush.bf16.msra.mxu0 0
        %869 = vmatpush.bf16.msra.mxu0 0
        %870 = vmatpush.bf16.msra.mxu0 0
        %871 = vmatpush.bf16.msra.mxu0 0
        %872 = vmatpush.bf16.msra.mxu0 0
        %873 = vmatpush.bf16.msra.mxu0 0
        %874 = vmatpush.bf16.msra.mxu0 0
        %875 = vmatpush.bf16.msra.mxu0 %v866
        %876 = vmatmul.bf16.gmra.mxu0 %v863
        %v877 = vpop.f32.mrf.mxu0
        %v878 = vadd.f32 0.0, %v877
        %v879 = vpop.f32.mrf.mxu0
        %880 = vdwg.mxu0
        %882 = vrot.lane.b32.xlu0 %v878, 8
        %v883 = vpop.permute.xlu0 %882
        %vm885 = vcmask 130112
        %886 = vst.msk [vmem:[#allocation2] sm:$0xff] %vm885, %v883
        %887 = vrot.lane.b32.xlu0 %v763, 112
        %v888 = vpop.permute.xlu0 %887
        %889 = vrot.lane.b32.xlu0 %v763, 80
        %v890 = vpop.permute.xlu0 %889
        %v892 = vsel %vm766, %v888, 0
        %v895 = vsel %vm766, %v890, 0
        %897 = vmatpush.bf16.xpose.msra.mxu0 0
        %898 = vmatpush.bf16.xpose.msra.mxu0 0
        %899 = vmatpush.bf16.xpose.msra.mxu0 0
        %900 = vmatpush.bf16.xpose.msra.mxu0 0
        %901 = vmatpush.bf16.xpose.msra.mxu0 0
        %902 = vmatpush.bf16.xpose.msra.mxu0 0
        %903 = vmatpush.bf16.xpose.msra.mxu0 0
        %904 = vmatpush.bf16.xpose.msra.mxu0 %v895
        %905 = vmatmul.bf16.gmra.mxu0 %v892
        %v906 = vpop.f32.mrf.mxu0
        %v907 = vadd.f32 0.0, %v906
        %v908 = vpop.f32.mrf.mxu0
        %909 = vdwg.mxu0
        %v910 = vmul.f32 %v907, 0.35355338
        %v911 = vsel %vm759, %v910, -1e+30
        %v912 = vsel %vm766, %v911, -inf
        %913 = vmax.xlane.f32.xlu0 %v912
        %v914 = vpop.xlane.xlu0 %913
        %v915 = vsub.f32 %v911, %v914
        %v916 = vmul.f32 %v915, 1.442695
        %v917 = vpow.pop %v916
        %v918 = vsel %vm766, %v917, 0.0
        %919 = vadd.xlane.f32.xlu0 %v918
        %v920 = vpop.xlane.xlu0 %919
        %v921 = vrcp.pop %v920
        %v922 = vmul.f32 %v917, %v921
        %v923 = vpack.c.bf16 %v922, %v922
        %924 = vrot.lane.b32.xlu0 %v763, 48
        %v925 = vpop.permute.xlu0 %924
        %v927 = vsel %vm766, %v923, 0
        %v930 = vsel %vm805, %v925, 0
        %932 = vmatpush.bf16.msra.mxu0 0
        %933 = vmatpush.bf16.msra.mxu0 0
        %934 = vmatpush.bf16.msra.mxu0 0
        %935 = vmatpush.bf16.msra.mxu0 0
        %936 = vmatpush.bf16.msra.mxu0 0
        %937 = vmatpush.bf16.msra.mxu0 0
        %938 = vmatpush.bf16.msra.mxu0 0
        %939 = vmatpush.bf16.msra.mxu0 %v930
        %940 = vmatmul.bf16.gmra.mxu0 %v927
        %v941 = vpop.f32.mrf.mxu0
        %v942 = vadd.f32 0.0, %v941
        %v943 = vpop.f32.mrf.mxu0
        %944 = vdwg.mxu0
        %946 = vrot.lane.b32.xlu0 %v942, 16
        %v947 = vpop.permute.xlu0 %946
        %vm949 = vcmask 195712
        %950 = vst.msk [vmem:[#allocation2] sm:$0xff] %vm949, %v947
        %951 = vrot.lane.b32.xlu0 %v763, 104
        %v952 = vpop.permute.xlu0 %951
        %953 = vrot.lane.b32.xlu0 %v763, 72
        %v954 = vpop.permute.xlu0 %953
        %v956 = vsel %vm766, %v952, 0
        %v959 = vsel %vm766, %v954, 0
        %961 = vmatpush.bf16.xpose.msra.mxu0 0
        %962 = vmatpush.bf16.xpose.msra.mxu0 0
        %963 = vmatpush.bf16.xpose.msra.mxu0 0
        %964 = vmatpush.bf16.xpose.msra.mxu0 0
        %965 = vmatpush.bf16.xpose.msra.mxu0 0
        %966 = vmatpush.bf16.xpose.msra.mxu0 0
        %967 = vmatpush.bf16.xpose.msra.mxu0 0
        %968 = vmatpush.bf16.xpose.msra.mxu0 %v959
        %969 = vmatmul.bf16.gmra.mxu0 %v956
        %v970 = vpop.f32.mrf.mxu0
        %v971 = vadd.f32 0.0, %v970
        %v972 = vpop.f32.mrf.mxu0
        %973 = vdwg.mxu0
        %v974 = vmul.f32 %v971, 0.35355338
        %v975 = vsel %vm759, %v974, -1e+30
        %v976 = vsel %vm766, %v975, -inf
        %977 = vmax.xlane.f32.xlu0 %v976
        %v978 = vpop.xlane.xlu0 %977
        %v979 = vsub.f32 %v975, %v978
        %v980 = vmul.f32 %v979, 1.442695
        %v981 = vpow.pop %v980
        %v982 = vsel %vm766, %v981, 0.0
        %983 = vadd.xlane.f32.xlu0 %v982
        %v984 = vpop.xlane.xlu0 %983
        %v985 = vrcp.pop %v984
        %v986 = vmul.f32 %v981, %v985
        %v987 = vpack.c.bf16 %v986, %v986
        %988 = vrot.lane.b32.xlu0 %v763, 40
        %v989 = vpop.permute.xlu0 %988
        %v991 = vsel %vm766, %v987, 0
        %v994 = vsel %vm805, %v989, 0
        %996 = vmatpush.bf16.msra.mxu0 0
        %997 = vmatpush.bf16.msra.mxu0 0
        %998 = vmatpush.bf16.msra.mxu0 0
        %999 = vmatpush.bf16.msra.mxu0 0
        %1000 = vmatpush.bf16.msra.mxu0 0
        %1001 = vmatpush.bf16.msra.mxu0 0
        %1002 = vmatpush.bf16.msra.mxu0 0
        %1003 = vmatpush.bf16.msra.mxu0 %v994
        %1004 = vmatmul.bf16.gmra.mxu0 %v991
        %v1005 = vpop.f32.mrf.mxu0
        %v1006 = vadd.f32 0.0, %v1005
        %v1007 = vpop.f32.mrf.mxu0
        %1008 = vdwg.mxu0
        %1010 = vrot.lane.b32.xlu0 %v1006, 24
        %v1011 = vpop.permute.xlu0 %1010
        %vm1013 = vcmask 261312
        %1014 = vst.msk [vmem:[#allocation2] sm:$0xff] %vm1013, %v1011
        %v1015 = vld [vmem:[#allocation2] sm:$0xff]
        %v1016 = vpack.c.bf16 %v1015, %v1015
        %v1017 = vld [vmem:[%s641] sm:$0xf]
        %v1018 = vld [vmem:[%s641 + $0x4] sm:$0xf]
        %v1019 = vld [vmem:[%s641 + $0x8] sm:$0xf]
        %v1020 = vld [vmem:[%s641 + $0xc] sm:$0xf]
        %v1021 = vld [vmem:[%s644] sm:$0x1]
        %v1023 = vperm.slane %v1021, 0
        %v1029 = vunpack.c.l.b16 %v1017
        %v1030 = vunpack.c.l.b16 %v1018
        %v1031 = vunpack.c.l.b16 %v1019
        %v1032 = vunpack.c.l.b16 %v1020
        %v1033 = vpack.c.b16 %v1030, %v1029
        %v1034 = vpack.c.b16 %v1032, %v1031
        %v1038 = vsel %vm680, %v1016, 0
        %1040 = vmatpush.bf16.msra.mxu0 0
        %1041 = vmatpush.bf16.msra.mxu0 0
        %1042 = vmatpush.bf16.msra.mxu0 0
        %1043 = vmatpush.bf16.msra.mxu0 0
        %1044 = vmatpush.bf16.msra.mxu0 0
        %1045 = vmatpush.bf16.msra.mxu0 0
        %1046 = vmatpush.bf16.msra.mxu0 %v1034
        %1047 = vmatpush.bf16.msra.mxu0 %v1033
        %1048 = vmatmul.bf16.gmra.mxu0 %v1038
        %v1049 = vpop.f32.mrf.mxu0
        %v1050 = vadd.f32 %v1023, %v1049
        %v1051 = vpop.f32.mrf.mxu0
        %1052 = vdwg.mxu0
        %v1053 = vadd.f32 %v677, %v1050
        %v1054 = vld [vmem:[%s647] sm:$0x1]
        %v1055 = vld [vmem:[%s650] sm:$0x1]
        %v1056 = vsel %vm680, %v1053, 0.0
        %1057 = vadd.xlane.f32.xlu0 %v1056
        %v1058 = vpop.xlane.xlu0 %1057
        %v1059 = vmul.f32 %v1058, %v690
        %v1060 = vsub.f32 %v1053, %v1059
        %v1061 = vmul.f32 %v1060, %v1060
        %v1062 = vsel %vm680, %v1061, 0.0
        %1063 = vadd.xlane.f32.xlu0 %v1062
        %v1064 = vpop.xlane.xlu0 %1063
        %v1065 = vmul.f32 %v1064, %v690
        %v1066 = vadd.f32 %v1065, 1e-05
        %v1067 = vrsqrt.pop %v1066
        %v1068 = vmul.f32 %v1067, %v1066
        %v1069 = vmul.f32 %v1068, %v1067
        %v1070 = vmul.f32 0.5, %v1069
        %v1071 = vsub.f32 1.5, %v1070
        %v1072 = vmul.f32 %v1067, %v1071
        %vm1073 = vweird.f32 %v1066
        %vm1074 = vweird.f32 %v1067
        %vm1075 = vmor %vm1073, %vm1074
        %v1076 = vsel %vm1075, %v1067, %v1072
        %v1077 = vmul.f32 %v1060, %v1076
        %v1079 = vperm.slane %v1054, 0
        %v1081 = vmul.f32 %v1077, %v1079
        %v1083 = vperm.slane %v1055, 0
        %v1085 = vadd.f32 %v1081, %v1083
        %v1086 = vpack.c.bf16 %v1085, %v1085
        %v1087 = vld [vmem:[%s655] sm:$0xf]
        %v1088 = vld [vmem:[%s655 + $0x4] sm:$0xf]
        %v1089 = vld [vmem:[%s655 + $0x8] sm:$0xf]
        %v1090 = vld [vmem:[%s655 + $0xc] sm:$0xf]
        %v1091 = vld [vmem:[%s658] sm:$0x1]
        %v1093 = vperm.slane %v1091, 0
        %v1099 = vunpack.c.l.b16 %v1087
        %v1100 = vunpack.c.l.b16 %v1088
        %v1101 = vunpack.c.l.b16 %v1089
        %v1102 = vunpack.c.l.b16 %v1090
        %v1103 = vpack.c.b16 %v1100, %v1099
        %v1104 = vpack.c.b16 %v1102, %v1101
        %v1108 = vsel %vm680, %v1086, 0
        %1110 = vmatpush.bf16.msra.mxu0 0
        %1111 = vmatpush.bf16.msra.mxu0 0
        %1112 = vmatpush.bf16.msra.mxu0 0
        %1113 = vmatpush.bf16.msra.mxu0 0
        %1114 = vmatpush.bf16.msra.mxu0 0
        %1115 = vmatpush.bf16.msra.mxu0 0
        %1116 = vmatpush.bf16.msra.mxu0 %v1104
        %1117 = vmatpush.bf16.msra.mxu0 %v1103
        %1118 = vmatmul.bf16.gmra.mxu0 %v1108
        %v1119 = vpop.f32.mrf.mxu0
        %v1120 = vadd.f32 %v1093, %v1119
        %v1121 = vpop.f32.mrf.mxu0
        %1122 = vdwg.mxu0
        %v1123 = vmul.f32 %v1120, 1.702
        %v1124 = vxor.u32 %v1123, 2147483648
        %v1125 = vmul.f32 %v1124, 1.442695
        %v1126 = vpow.pop %v1125
        %v1127 = vadd.f32 %v1126, 1.0
        %v1128 = vrcp.pop %v1127
        %v1129 = vmul.f32 %v1127, %v1128
        %v1130 = vsub.f32 1.0, %v1129
        %v1131 = vmul.f32 %v1128, %v1130
        %v1132 = vadd.f32 %v1128, %v1131
        %vm1133 = vweird.f32 %v1127
        %vm1134 = vweird.f32 %v1128
        %vm1135 = vmor %vm1133, %vm1134
        %v1136 = vsel %vm1135, %v1128, %v1132
        %v1137 = vand.u32 2147483647, %v1127
        %vm1138 = vcmp.eq.f32.partialorder %v1137, 8.507059e+37
        %v1139 = vand.u32 %v1127, 2147483648
        %v1140 = vor.u32 1.1754944e-38, %v1139
        %v1141 = vsel %vm1138, %v1140, %v1136
        %v1142 = vmul.f32 1.0, %v1141
        %v1143 = vmul.f32 %v1120, %v1142
        %v1144 = vpack.c.bf16 %v1143, %v1143
        %v1145 = vld [vmem:[%s663] sm:$0xf]
        %v1146 = vld [vmem:[%s663 + $0x4] sm:$0xf]
        %v1147 = vld [vmem:[%s663 + $0x8] sm:$0xf]
        %v1148 = vld [vmem:[%s663 + $0xc] sm:$0xf]
        %v1149 = vld [vmem:[%s663 + $0x10] sm:$0xf]
        %v1150 = vld [vmem:[%s663 + $0x14] sm:$0xf]
        %v1151 = vld [vmem:[%s663 + $0x18] sm:$0xf]
        %v1152 = vld [vmem:[%s663 + $0x1c] sm:$0xf]
        %v1153 = vld [vmem:[%s663 + $0x20] sm:$0xf]
        %v1154 = vld [vmem:[%s663 + $0x24] sm:$0xf]
        %v1155 = vld [vmem:[%s663 + $0x28] sm:$0xf]
        %v1156 = vld [vmem:[%s663 + $0x2c] sm:$0xf]
        %v1157 = vld [vmem:[%s663 + $0x30] sm:$0xf]
        %v1158 = vld [vmem:[%s663 + $0x34] sm:$0xf]
        %v1159 = vld [vmem:[%s663 + $0x38] sm:$0xf]
        %v1160 = vld [vmem:[%s663 + $0x3c] sm:$0xf]
        %v1161 = vld [vmem:[%s666] sm:$0x1]
        %v1163 = vperm.slane %v1161, 0
        %v1181 = vunpack.c.l.b16 %v1145
        %v1182 = vunpack.c.l.b16 %v1146
        %v1183 = vunpack.c.l.b16 %v1147
        %v1184 = vunpack.c.l.b16 %v1148
        %v1185 = vunpack.c.l.b16 %v1149
        %v1186 = vunpack.c.l.b16 %v1150
        %v1187 = vunpack.c.l.b16 %v1151
        %v1188 = vunpack.c.l.b16 %v1152
        %v1189 = vunpack.c.l.b16 %v1153
        %v1190 = vunpack.c.l.b16 %v1154
        %v1191 = vunpack.c.l.b16 %v1155
        %v1192 = vunpack.c.l.b16 %v1156
        %v1193 = vunpack.c.l.b16 %v1157
        %v1194 = vunpack.c.l.b16 %v1158
        %v1195 = vunpack.c.l.b16 %v1159
        %v1196 = vunpack.c.l.b16 %v1160
        %v1197 = vpack.c.b16 %v1182, %v1181
        %v1198 = vpack.c.b16 %v1184, %v1183
        %v1199 = vpack.c.b16 %v1186, %v1185
        %v1200 = vpack.c.b16 %v1188, %v1187
        %v1201 = vpack.c.b16 %v1190, %v1189
        %v1202 = vpack.c.b16 %v1192, %v1191
        %v1203 = vpack.c.b16 %v1194, %v1193
        %v1204 = vpack.c.b16 %v1196, %v1195
        %1213 = vmatpush.bf16.msra.mxu0 %v1204
        %1214 = vmatpush.bf16.msra.mxu0 %v1203
        %1215 = vmatpush.bf16.msra.mxu0 %v1202
        %1216 = vmatpush.bf16.msra.mxu0 %v1201
        %1217 = vmatpush.bf16.msra.mxu0 %v1200
        %1218 = vmatpush.bf16.msra.mxu0 %v1199
        %1219 = vmatpush.bf16.msra.mxu0 %v1198
        %1220 = vmatpush.bf16.msra.mxu0 %v1197
        %1221 = vmatmul.bf16.gmra.mxu0 %v1144
        %v1222 = vpop.f32.mrf.mxu0
        %v1223 = vadd.f32 %v1163, %v1222
        %v1224 = vpop.f32.mrf.mxu0
        %1225 = vdwg.mxu0
        %v1226 = vadd.f32 %v1053, %v1223
        %1227 = vst.msk [vmem:[%s618] sm:$0xff] %vm680, %v1226
        %s1228 = sand.u32 %s407, 1
        %s1229 = scalar_lea.sflag [#allocation4], %s1228
        %s1230 = sand.u32 %s407, 1
        %s1231 = smul.addr %s1230, 8
        %s1232 = scalar_lea.vmem [#allocation3], %s1231
        // Predicated region
        $region81: #{tpu_custom_call.1} parent=75 // pred_check
          %p1233 = pneg %p417
        $region82: #{tpu_custom_call.1} parent=75 // pred_check_branch
          %1235 = sbr.rel (%p1233) target = $region84
        $region83: #{tpu_custom_call.1} parent=75 // pred_region
          %1237 = vsyncadd %s1229, 0
          %s1238 = smul.addr %s32, 8
          %s1239 = scalar_lea.hbm %s14, %s1238
          %s1241 = sshll.u32 %s1232, 4
          %s1242 = int_to_ptr.vmem [resolvable:$true] %s1241
          %s1243 = sshll.u32 %s1239, 4
          %s1244 = int_to_ptr.hbm [resolvable:$true] %s1243
          %1246 = dma.vmem_to_hbm [thread:$0]  %s1242, 128, %s1244, %s1229
        $region84: #{tpu_custom_call.1} parent=75 // pred_fallthru
          _
      $region76: #{tpu_custom_call.1} parent=5 // pred_fallthru
        _
      %p1247 = scmp.le.s32.totalorder 2, %s23
      // Predicated region
      $region85: #{tpu_custom_call.1} parent=5 // pred_check
        %p1248 = pneg %p1247
      $region86: #{tpu_custom_call.1} parent=5 // pred_check_branch
        %1250 = sbr.rel (%p1248) target = $region88
      $region87: #{tpu_custom_call.1} parent=5 // pred_region
        %s1251 = ssub.s32 %s23, 2
        // Predicated region
        $region89: #{tpu_custom_call.1} parent=87 // pred_check
          %p1252 = pneg %p423
        $region90: #{tpu_custom_call.1} parent=87 // pred_check_branch
          %1254 = sbr.rel (%p1252) target = $region92
        $region91: #{tpu_custom_call.1} parent=87 // pred_region
          %s1255 = sand.u32 %s408, 1
          %s1256 = scalar_lea.sflag [#allocation4], %s1255
          %s1257 = sand.u32 %s408, 1
          %s1258 = smul.addr %s1257, 8
          %s1259 = scalar_lea.vmem [#allocation3], %s1258
          %1261 = dma.done %s1256, 128
        $region92: #{tpu_custom_call.1} parent=87 // pred_fallthru
          _
      $region88: #{tpu_custom_call.1} parent=5 // pred_fallthru
        _
    $region6: #{tpu_custom_call.1} parent=1 // loop_footer
      %s27 = sadd.s32 1, %s23
    $region7: #{tpu_custom_call.1} parent=1 // loop_footer_branch
      %22 = sbr.rel target = $region3
    $region8: #{tpu_custom_call.1} parent=1 // loop_exit
      _
    %1262 = vsyncpa [#allocation4], 1
    %s1263 = scalar_lea.sflag [#allocation4], 1
    %1264 = vsyncpa %s1263, 1

</llo_original>
